<compile_context>
chip_gen: v7x
topology: tpu7x:2x2x1
jax: 0.10.0
libtpu: 0.0.40
codegen_flags: <defaults>
</compile_context>

<pallas_src>
import functools

import jax
import jax.numpy as jnp
from jax.experimental import pallas as pl
from jax.experimental.pallas import tpu as pltpu

LATENT = 10      # true latent size (fc21/fc22 output)
LAT_PAD = 128    # lane-padded latent width
TILE_B = 128     # batch rows per grid step


def vae_kernel(x_ref, eps_ref,
               w1_ref, b1_ref, w2_ref, b2_ref,
               wml_ref, bml_ref,
               w3a_ref, b3a_ref, w3b_ref, b3b_ref, w3c_ref, b3c_ref,
               recon_ref, muvar_ref):
    f32 = jnp.float32
    bf16 = jnp.bfloat16

    def dot(a, w_ref):
        # bf16 inputs to the MXU, f32 accumulation.
        return jnp.dot(a.astype(bf16), w_ref[...], preferred_element_type=f32)

    x = x_ref[...]

    # ---- encode: Linear(dim, dim/4) -> Tanh -> Linear(dim/4, dim/16) -> Tanh
    h = jnp.tanh(dot(x, w1_ref) + b1_ref[...])
    h = jnp.tanh(dot(h, w2_ref) + b2_ref[...])

    # ---- fused fc21 / fc22: one lane-dense matmul -> (TB, 2*LAT_PAD)
    muvar = dot(h, wml_ref) + bml_ref[...]
    muvar_ref[...] = muvar                      # lane-dense store (256 lanes)

    mu_p = muvar[:, :LAT_PAD]                   # vreg-aligned slices
    logvar_p = muvar[:, LAT_PAD:]

    # ---- reparameterize: z = eps * exp(0.5 * logvar) + mu   (f32 on VPU/EUP)
    z = eps_ref[...] * jnp.exp(0.5 * logvar_p) + mu_p

    # ---- decode: Linear(10,d16)->Tanh->Linear(d16,d4)->Tanh->Linear(d4,dim)->Sigmoid
    d = jnp.tanh(dot(z, w3a_ref) + b3a_ref[...])
    d = jnp.tanh(dot(d, w3b_ref) + b3b_ref[...])
    d = dot(d, w3c_ref) + b3c_ref[...]
    # sigmoid via tanh identity -> EUP slot, no full-width VPU divide
    recon_ref[...] = 0.5 * (jnp.tanh(0.5 * d) + 1.0)


@functools.partial(jax.jit, static_argnames=("tile_b",))
def vae_forward(x, eps_pad, params, *, tile_b=TILE_B):
    B, dim = x.shape
    grid = (pl.cdiv(B, tile_b),)

    in_specs = [
        pl.BlockSpec((tile_b, dim), lambda i: (i, 0)),       # x tile
        pl.BlockSpec((tile_b, LAT_PAD), lambda i: (i, 0)),    # eps tile
    ] + [
        pl.BlockSpec(p.shape, lambda i: (0, 0)) for p in params  # weights stay resident
    ]
    out_specs = (
        pl.BlockSpec((tile_b, dim), lambda i: (i, 0)),            # reconstruction
        pl.BlockSpec((tile_b, 2 * LAT_PAD), lambda i: (i, 0)),    # [mu | logvar] slab
    )
    out_shapes = (
        jax.ShapeDtypeStruct((B, dim), jnp.float32),
        jax.ShapeDtypeStruct((B, 2 * LAT_PAD), jnp.float32),
    )

    recon, muvar = pl.pallas_call(
        vae_kernel,
        out_shape=out_shapes,
        grid=grid,
        in_specs=in_specs,
        out_specs=out_specs,
        compiler_params=pltpu.CompilerParams(
            dimension_semantics=("parallel",)),
    )(x, eps_pad, *params)

    mu = muvar[:, :LATENT]
    logvar = muvar[:, LAT_PAD:LAT_PAD + LATENT]
    return recon, mu, logvar


# ----------------------------------------------------------------------------
# Parameter construction (PyTorch nn.Linear default init, then pad + cast)
# ----------------------------------------------------------------------------
def _init_linear(key, fan_in, fan_out):
    """U(-1/sqrt(fan_in), 1/sqrt(fan_in)); weight stored as [in, out]."""
    kw, kb = jax.random.split(key)
    bound = 1.0 / jnp.sqrt(jnp.float32(fan_in))
    w = jax.random.uniform(kw, (fan_in, fan_out), jnp.float32, -bound, bound)
    b = jax.random.uniform(kb, (1, fan_out), jnp.float32, -bound, bound)
    return w, b


def init_vae_params(key, dim):
    d4, d16 = dim // 4, dim // 16
    keys = jax.random.split(key, 7)

    w1, b1 = _init_linear(keys[0], dim, d4)       # fc1[0]
    w2, b2 = _init_linear(keys[1], d4, d16)       # fc1[2]
    w21, b21 = _init_linear(keys[2], d16, LATENT)  # fc21
    w22, b22 = _init_linear(keys[3], d16, LATENT)  # fc22
    w3a, b3a = _init_linear(keys[4], LATENT, d16)  # fc3[0]
    w3b, b3b = _init_linear(keys[5], d16, d4)      # fc3[2]
    w3c, b3c = _init_linear(keys[6], d4, dim)      # fc3[4]

    # Fused, lane-padded mu/logvar head: [d16, 2*LAT_PAD]
    wml = jnp.zeros((d16, 2 * LAT_PAD), jnp.float32)
    wml = wml.at[:, :LATENT].set(w21)
    wml = wml.at[:, LAT_PAD:LAT_PAD + LATENT].set(w22)
    bml = jnp.zeros((1, 2 * LAT_PAD), jnp.float32)
    bml = bml.at[:, :LATENT].set(b21[0])
    bml = bml.at[:, LAT_PAD:LAT_PAD + LATENT].set(b22[0])

    # Decoder first layer: pad latent rows 10 -> LAT_PAD with zeros.
    w3a_p = jnp.zeros((LAT_PAD, d16), jnp.float32).at[:LATENT, :].set(w3a)

    bf16 = jnp.bfloat16
    params = (
        w1.astype(bf16), b1,
        w2.astype(bf16), b2,
        wml.astype(bf16), bml,
        w3a_p.astype(bf16), b3a,
        w3b.astype(bf16), b3b,
        w3c.astype(bf16), b3c,
    )
    return params


# ----------------------------------------------------------------------------
# Pure-JAX reference (same bf16-weight math) for correctness check
# ----------------------------------------------------------------------------
def ref_forward(x, eps_pad, params):
    (w1, b1, w2, b2, wml, bml, w3a, b3a, w3b, b3b, w3c, b3c) = params
    bf16 = jnp.bfloat16
    dot = lambda a, w: jnp.dot(a.astype(bf16), w, preferred_element_type=jnp.float32)
    h = jnp.tanh(dot(x, w1) + b1)
    h = jnp.tanh(dot(h, w2) + b2)
    muvar = dot(h, wml) + bml
    mu_p, lv_p = muvar[:, :LAT_PAD], muvar[:, LAT_PAD:]
    z = eps_pad * jnp.exp(0.5 * lv_p) + mu_p
    d = jnp.tanh(dot(z, w3a) + b3a)
    d = jnp.tanh(dot(d, w3b) + b3b)
    d = dot(d, w3c) + b3c
    return jax.nn.sigmoid(d), mu_p[:, :LATENT], lv_p[:, :LATENT]


if __name__ == "__main__":
    dim = 256       # divisible by 16: d4=64, d16=16
    batch = 256     # 2 grid steps of TILE_B=128 rows

    key = jax.random.PRNGKey(0)
    k_params, k_x, k_eps = jax.random.split(key, 3)

    params = init_vae_params(k_params, dim)
    x = jax.random.uniform(k_x, (batch, dim), jnp.float32)        # data input
    eps = jax.random.normal(k_eps, (batch, LATENT), jnp.float32)  # reparam noise
    eps_pad = jnp.pad(eps, ((0, 0), (0, LAT_PAD - LATENT)))       # lane-pad with zeros

    recon, mu, logvar = vae_forward(x, eps_pad, params)
    jax.block_until_ready((recon, mu, logvar))

    r_ref, mu_ref, lv_ref = ref_forward(x, eps_pad, params)
    assert recon.shape == (batch, dim)
    assert mu.shape == (batch, LATENT) and logvar.shape == (batch, LATENT)
    assert jnp.allclose(recon, r_ref, atol=5e-3), float(jnp.max(jnp.abs(recon - r_ref)))
    assert jnp.allclose(mu, mu_ref, atol=5e-3), float(jnp.max(jnp.abs(mu - mu_ref)))
    assert jnp.allclose(logvar, lv_ref, atol=5e-3), float(jnp.max(jnp.abs(logvar - lv_ref)))

    print("KERNEL_OK")
</pallas_src>

<mosaic_0001>
module attributes {stable_mosaic.version = 11 : i64} {
  func.func @vae_kernel(%arg0: i32, %arg1: memref<128x256xf32, #tpu.memory_space<vmem>>, %arg2: memref<128x128xf32, #tpu.memory_space<vmem>>, %arg3: memref<256x64xbf16, #tpu.memory_space<vmem>>, %arg4: memref<1x64xf32, #tpu.memory_space<vmem>>, %arg5: memref<64x16xbf16, #tpu.memory_space<vmem>>, %arg6: memref<1x16xf32, #tpu.memory_space<vmem>>, %arg7: memref<16x256xbf16, #tpu.memory_space<vmem>>, %arg8: memref<1x256xf32, #tpu.memory_space<vmem>>, %arg9: memref<128x16xbf16, #tpu.memory_space<vmem>>, %arg10: memref<1x16xf32, #tpu.memory_space<vmem>>, %arg11: memref<16x64xbf16, #tpu.memory_space<vmem>>, %arg12: memref<1x64xf32, #tpu.memory_space<vmem>>, %arg13: memref<64x256xbf16, #tpu.memory_space<vmem>>, %arg14: memref<1x256xf32, #tpu.memory_space<vmem>>, %arg15: memref<128x256xf32, #tpu.memory_space<vmem>>, %arg16: memref<128x256xf32, #tpu.memory_space<vmem>>) attributes {dimension_semantics = [#tpu.dimension_semantics<parallel>], iteration_bounds = array<i64: 2>, scalar_prefetch = 0 : i64, scratch_operands = 0 : i64, tpu.core_type = #tpu.core_type<tc>, window_params = [{transform_indices = @transform_0, window_bounds = array<i64: 128, 256>}, {transform_indices = @transform_1, window_bounds = array<i64: 128, 128>}, {pipeline_mode = #tpu.pipeline_mode<synchronous>, transform_indices = @transform_2, window_bounds = array<i64: 256, 64>}, {pipeline_mode = #tpu.pipeline_mode<synchronous>, transform_indices = @transform_3, window_bounds = array<i64: 1, 64>}, {pipeline_mode = #tpu.pipeline_mode<synchronous>, transform_indices = @transform_4, window_bounds = array<i64: 64, 16>}, {pipeline_mode = #tpu.pipeline_mode<synchronous>, transform_indices = @transform_5, window_bounds = array<i64: 1, 16>}, {pipeline_mode = #tpu.pipeline_mode<synchronous>, transform_indices = @transform_6, window_bounds = array<i64: 16, 256>}, {pipeline_mode = #tpu.pipeline_mode<synchronous>, transform_indices = @transform_7, window_bounds = array<i64: 1, 256>}, {pipeline_mode = #tpu.pipeline_mode<synchronous>, transform_indices = @transform_8, window_bounds = array<i64: 128, 16>}, {pipeline_mode = #tpu.pipeline_mode<synchronous>, transform_indices = @transform_9, window_bounds = array<i64: 1, 16>}, {pipeline_mode = #tpu.pipeline_mode<synchronous>, transform_indices = @transform_10, window_bounds = array<i64: 16, 64>}, {pipeline_mode = #tpu.pipeline_mode<synchronous>, transform_indices = @transform_11, window_bounds = array<i64: 1, 64>}, {pipeline_mode = #tpu.pipeline_mode<synchronous>, transform_indices = @transform_12, window_bounds = array<i64: 64, 256>}, {pipeline_mode = #tpu.pipeline_mode<synchronous>, transform_indices = @transform_13, window_bounds = array<i64: 1, 256>}, {transform_indices = @transform_14, window_bounds = array<i64: 128, 256>}, {transform_indices = @transform_15, window_bounds = array<i64: 128, 256>}]} {
    %c0 = arith.constant 0 : index
    %c0_0 = arith.constant 0 : index
    %0 = vector.load %arg1[%c0, %c0_0] : memref<128x256xf32, #tpu.memory_space<vmem>>, vector<128x256xf32>
    %1 = arith.truncf %0 : vector<128x256xf32> to vector<128x256xbf16>
    %c0_1 = arith.constant 0 : index
    %c0_2 = arith.constant 0 : index
    %2 = vector.load %arg3[%c0_1, %c0_2] : memref<256x64xbf16, #tpu.memory_space<vmem>>, vector<256x64xbf16>
    %cst = arith.constant dense<0.000000e+00> : vector<128x64xf32>
    %3 = tpu.matmul %1, %2, %cst {dimension_numbers = #tpu.dot_dimension_numbers<[1], [0], [0], [1], [0, 0, 1, 1], [], []>} : vector<128x256xbf16>, vector<256x64xbf16>, vector<128x64xf32> -> vector<128x64xf32>
    %c0_3 = arith.constant 0 : index
    %c0_4 = arith.constant 0 : index
    %4 = vector.load %arg4[%c0_3, %c0_4] : memref<1x64xf32, #tpu.memory_space<vmem>>, vector<1x64xf32>
    %5 = vector.broadcast %4 : vector<1x64xf32> to vector<128x64xf32>
    %6 = arith.addf %3, %5 : vector<128x64xf32>
    %7 = math.tanh %6 : vector<128x64xf32>
    %8 = arith.truncf %7 : vector<128x64xf32> to vector<128x64xbf16>
    %c0_5 = arith.constant 0 : index
    %c0_6 = arith.constant 0 : index
    %9 = vector.load %arg5[%c0_5, %c0_6] : memref<64x16xbf16, #tpu.memory_space<vmem>>, vector<64x16xbf16>
    %cst_7 = arith.constant dense<0.000000e+00> : vector<128x16xf32>
    %10 = tpu.matmul %8, %9, %cst_7 {dimension_numbers = #tpu.dot_dimension_numbers<[1], [0], [0], [1], [0, 0, 1, 1], [], []>} : vector<128x64xbf16>, vector<64x16xbf16>, vector<128x16xf32> -> vector<128x16xf32>
    %c0_8 = arith.constant 0 : index
    %c0_9 = arith.constant 0 : index
    %11 = vector.load %arg6[%c0_8, %c0_9] : memref<1x16xf32, #tpu.memory_space<vmem>>, vector<1x16xf32>
    %12 = vector.broadcast %11 : vector<1x16xf32> to vector<128x16xf32>
    %13 = arith.addf %10, %12 : vector<128x16xf32>
    %14 = math.tanh %13 : vector<128x16xf32>
    %15 = arith.truncf %14 : vector<128x16xf32> to vector<128x16xbf16>
    %c0_10 = arith.constant 0 : index
    %c0_11 = arith.constant 0 : index
    %16 = vector.load %arg7[%c0_10, %c0_11] : memref<16x256xbf16, #tpu.memory_space<vmem>>, vector<16x256xbf16>
    %cst_12 = arith.constant dense<0.000000e+00> : vector<128x256xf32>
    %17 = tpu.matmul %15, %16, %cst_12 {dimension_numbers = #tpu.dot_dimension_numbers<[1], [0], [0], [1], [0, 0, 1, 1], [], []>} : vector<128x16xbf16>, vector<16x256xbf16>, vector<128x256xf32> -> vector<128x256xf32>
    %c0_13 = arith.constant 0 : index
    %c0_14 = arith.constant 0 : index
    %18 = vector.load %arg8[%c0_13, %c0_14] : memref<1x256xf32, #tpu.memory_space<vmem>>, vector<1x256xf32>
    %19 = vector.broadcast %18 : vector<1x256xf32> to vector<128x256xf32>
    %20 = arith.addf %17, %19 : vector<128x256xf32>
    %c0_15 = arith.constant 0 : index
    %c0_16 = arith.constant 0 : index
    %21 = vector.load %arg16[%c0_15, %c0_16] : memref<128x256xf32, #tpu.memory_space<vmem>>, vector<128x256xf32>
    tpu.vector_store %arg16[%c0_15, %c0_16], %20 {strides = array<i32>} : memref<128x256xf32, #tpu.memory_space<vmem>>, vector<128x256xf32>,
    %22 = vector.extract_strided_slice %20 {offsets = [0, 0], sizes = [128, 128], strides = [1, 1]} : vector<128x256xf32> to vector<128x128xf32>
    %23 = vector.extract_strided_slice %20 {offsets = [0, 128], sizes = [128, 128], strides = [1, 1]} : vector<128x256xf32> to vector<128x128xf32>
    %c0_17 = arith.constant 0 : index
    %c0_18 = arith.constant 0 : index
    %24 = vector.load %arg2[%c0_17, %c0_18] : memref<128x128xf32, #tpu.memory_space<vmem>>, vector<128x128xf32>
    %cst_19 = arith.constant 5.000000e-01 : f32
    %25 = vector.broadcast %cst_19 : f32 to vector<128x128xf32>
    %26 = arith.mulf %25, %23 : vector<128x128xf32>
    %27 = math.exp %26 : vector<128x128xf32>
    %28 = arith.mulf %24, %27 : vector<128x128xf32>
    %29 = arith.addf %28, %22 : vector<128x128xf32>
    %30 = arith.truncf %29 : vector<128x128xf32> to vector<128x128xbf16>
    %c0_20 = arith.constant 0 : index
    %c0_21 = arith.constant 0 : index
    %31 = vector.load %arg9[%c0_20, %c0_21] : memref<128x16xbf16, #tpu.memory_space<vmem>>, vector<128x16xbf16>
    %cst_22 = arith.constant dense<0.000000e+00> : vector<128x16xf32>
    %32 = tpu.matmul %30, %31, %cst_22 {dimension_numbers = #tpu.dot_dimension_numbers<[1], [0], [0], [1], [0, 0, 1, 1], [], []>} : vector<128x128xbf16>, vector<128x16xbf16>, vector<128x16xf32> -> vector<128x16xf32>
    %c0_23 = arith.constant 0 : index
    %c0_24 = arith.constant 0 : index
    %33 = vector.load %arg10[%c0_23, %c0_24] : memref<1x16xf32, #tpu.memory_space<vmem>>, vector<1x16xf32>
    %34 = vector.broadcast %33 : vector<1x16xf32> to vector<128x16xf32>
    %35 = arith.addf %32, %34 : vector<128x16xf32>
    %36 = math.tanh %35 : vector<128x16xf32>
    %37 = arith.truncf %36 : vector<128x16xf32> to vector<128x16xbf16>
    %c0_25 = arith.constant 0 : index
    %c0_26 = arith.constant 0 : index
    %38 = vector.load %arg11[%c0_25, %c0_26] : memref<16x64xbf16, #tpu.memory_space<vmem>>, vector<16x64xbf16>
    %cst_27 = arith.constant dense<0.000000e+00> : vector<128x64xf32>
    %39 = tpu.matmul %37, %38, %cst_27 {dimension_numbers = #tpu.dot_dimension_numbers<[1], [0], [0], [1], [0, 0, 1, 1], [], []>} : vector<128x16xbf16>, vector<16x64xbf16>, vector<128x64xf32> -> vector<128x64xf32>
    %c0_28 = arith.constant 0 : index
    %c0_29 = arith.constant 0 : index
    %40 = vector.load %arg12[%c0_28, %c0_29] : memref<1x64xf32, #tpu.memory_space<vmem>>, vector<1x64xf32>
    %41 = vector.broadcast %40 : vector<1x64xf32> to vector<128x64xf32>
    %42 = arith.addf %39, %41 : vector<128x64xf32>
    %43 = math.tanh %42 : vector<128x64xf32>
    %44 = arith.truncf %43 : vector<128x64xf32> to vector<128x64xbf16>
    %c0_30 = arith.constant 0 : index
    %c0_31 = arith.constant 0 : index
    %45 = vector.load %arg13[%c0_30, %c0_31] : memref<64x256xbf16, #tpu.memory_space<vmem>>, vector<64x256xbf16>
    %cst_32 = arith.constant dense<0.000000e+00> : vector<128x256xf32>
    %46 = tpu.matmul %44, %45, %cst_32 {dimension_numbers = #tpu.dot_dimension_numbers<[1], [0], [0], [1], [0, 0, 1, 1], [], []>} : vector<128x64xbf16>, vector<64x256xbf16>, vector<128x256xf32> -> vector<128x256xf32>
    %c0_33 = arith.constant 0 : index
    %c0_34 = arith.constant 0 : index
    %47 = vector.load %arg14[%c0_33, %c0_34] : memref<1x256xf32, #tpu.memory_space<vmem>>, vector<1x256xf32>
    %48 = vector.broadcast %47 : vector<1x256xf32> to vector<128x256xf32>
    %49 = arith.addf %46, %48 : vector<128x256xf32>
    %cst_35 = arith.constant 5.000000e-01 : f32
    %50 = vector.broadcast %cst_35 : f32 to vector<128x256xf32>
    %51 = arith.mulf %50, %49 : vector<128x256xf32>
    %52 = math.tanh %51 : vector<128x256xf32>
    %cst_36 = arith.constant 1.000000e+00 : f32
    %53 = vector.broadcast %cst_36 : f32 to vector<128x256xf32>
    %54 = arith.addf %52, %53 : vector<128x256xf32>
    %cst_37 = arith.constant 5.000000e-01 : f32
    %55 = vector.broadcast %cst_37 : f32 to vector<128x256xf32>
    %56 = arith.mulf %55, %54 : vector<128x256xf32>
    %c0_38 = arith.constant 0 : index
    %c0_39 = arith.constant 0 : index
    %57 = vector.load %arg15[%c0_38, %c0_39] : memref<128x256xf32, #tpu.memory_space<vmem>>, vector<128x256xf32>
    tpu.vector_store %arg15[%c0_38, %c0_39], %56 {strides = array<i32>} : memref<128x256xf32, #tpu.memory_space<vmem>>, vector<128x256xf32>,
    return
  }
  func.func @transform_0(%arg0: i32) -> (i32, i32) {
    %c0_i32 = arith.constant 0 : i32
    %c0_i32_0 = arith.constant 0 : i32
    return %arg0, %c0_i32 : i32, i32
  }
  func.func @transform_1(%arg0: i32) -> (i32, i32) {
    %c0_i32 = arith.constant 0 : i32
    %c0_i32_0 = arith.constant 0 : i32
    return %arg0, %c0_i32 : i32, i32
  }
  func.func @transform_2(%arg0: i32) -> (i32, i32) {
    %c0_i32 = arith.constant 0 : i32
    %c0_i32_0 = arith.constant 0 : i32
    %c0_i32_1 = arith.constant 0 : i32
    return %c0_i32, %c0_i32_0 : i32, i32
  }
  func.func @transform_3(%arg0: i32) -> (i32, i32) {
    %c0_i32 = arith.constant 0 : i32
    %c0_i32_0 = arith.constant 0 : i32
    %c0_i32_1 = arith.constant 0 : i32
    return %c0_i32, %c0_i32_0 : i32, i32
  }
  func.func @transform_4(%arg0: i32) -> (i32, i32) {
    %c0_i32 = arith.constant 0 : i32
    %c0_i32_0 = arith.constant 0 : i32
    %c0_i32_1 = arith.constant 0 : i32
    return %c0_i32, %c0_i32_0 : i32, i32
  }
  func.func @transform_5(%arg0: i32) -> (i32, i32) {
    %c0_i32 = arith.constant 0 : i32
    %c0_i32_0 = arith.constant 0 : i32
    %c0_i32_1 = arith.constant 0 : i32
    return %c0_i32, %c0_i32_0 : i32, i32
  }
  func.func @transform_6(%arg0: i32) -> (i32, i32) {
    %c0_i32 = arith.constant 0 : i32
    %c0_i32_0 = arith.constant 0 : i32
    %c0_i32_1 = arith.constant 0 : i32
    return %c0_i32, %c0_i32_0 : i32, i32
  }
  func.func @transform_7(%arg0: i32) -> (i32, i32) {
    %c0_i32 = arith.constant 0 : i32
    %c0_i32_0 = arith.constant 0 : i32
    %c0_i32_1 = arith.constant 0 : i32
    return %c0_i32, %c0_i32_0 : i32, i32
  }
  func.func @transform_8(%arg0: i32) -> (i32, i32) {
    %c0_i32 = arith.constant 0 : i32
    %c0_i32_0 = arith.constant 0 : i32
    %c0_i32_1 = arith.constant 0 : i32
    return %c0_i32, %c0_i32_0 : i32, i32
  }
  func.func @transform_9(%arg0: i32) -> (i32, i32) {
    %c0_i32 = arith.constant 0 : i32
    %c0_i32_0 = arith.constant 0 : i32
    %c0_i32_1 = arith.constant 0 : i32
    return %c0_i32, %c0_i32_0 : i32, i32
  }
  func.func @transform_10(%arg0: i32) -> (i32, i32) {
    %c0_i32 = arith.constant 0 : i32
    %c0_i32_0 = arith.constant 0 : i32
    %c0_i32_1 = arith.constant 0 : i32
    return %c0_i32, %c0_i32_0 : i32, i32
  }
  func.func @transform_11(%arg0: i32) -> (i32, i32) {
    %c0_i32 = arith.constant 0 : i32
    %c0_i32_0 = arith.constant 0 : i32
    %c0_i32_1 = arith.constant 0 : i32
    return %c0_i32, %c0_i32_0 : i32, i32
  }
  func.func @transform_12(%arg0: i32) -> (i32, i32) {
    %c0_i32 = arith.constant 0 : i32
    %c0_i32_0 = arith.constant 0 : i32
    %c0_i32_1 = arith.constant 0 : i32
    return %c0_i32, %c0_i32_0 : i32, i32
  }
  func.func @transform_13(%arg0: i32) -> (i32, i32) {
    %c0_i32 = arith.constant 0 : i32
    %c0_i32_0 = arith.constant 0 : i32
    %c0_i32_1 = arith.constant 0 : i32
    return %c0_i32, %c0_i32_0 : i32, i32
  }
  func.func @transform_14(%arg0: i32) -> (i32, i32) {
    %c0_i32 = arith.constant 0 : i32
    %c0_i32_0 = arith.constant 0 : i32
    return %arg0, %c0_i32 : i32, i32
  }
  func.func @transform_15(%arg0: i32) -> (i32, i32) {
    %c0_i32 = arith.constant 0 : i32
    %c0_i32_0 = arith.constant 0 : i32
    return %arg0, %c0_i32 : i32, i32
  }
}

</mosaic_0001>

<llo_original>
// kernel: vae_forward.1
$region0: #{vae_forward.1}
  #allocation0 [shape = 'u32[]', space=smem, size = 0x4, offset = 0x4, fixed_abs, tag = 'smem constant byte address 0x4 - core index']
  #allocation1 [shape = 'u32[144,128]{1,0:T(1,128)}', space=vmem, size = 0x12000, scoped, tag = 'internal scratch']
  %s0 = inlined_call_operand.hbm [shape: f32[256,256], index: 0, kind: input, shape index: {}]
  %s1 = inlined_call_operand.vmem [shape: f32[256,128], index: 1, kind: input, shape index: {}]
  %s2 = inlined_call_operand.vmem [shape: bf16[256,64], index: 2, kind: input, shape index: {}]
  %s3 = inlined_call_operand.hbm [shape: f32[1,64], index: 3, kind: input, shape index: {}]
  %s4 = inlined_call_operand.vmem [shape: bf16[64,16], index: 4, kind: input, shape index: {}]
  %s5 = inlined_call_operand.hbm [shape: f32[1,16], index: 5, kind: input, shape index: {}]
  %s6 = inlined_call_operand.hbm [shape: bf16[16,256], index: 6, kind: input, shape index: {}]
  %s7 = inlined_call_operand.vmem [shape: f32[1,256], index: 7, kind: input, shape index: {}]
  %s8 = inlined_call_operand.vmem [shape: bf16[128,16], index: 8, kind: input, shape index: {}]
  %s9 = inlined_call_operand.vmem [shape: f32[1,16], index: 9, kind: input, shape index: {}]
  %s10 = inlined_call_operand.vmem [shape: bf16[16,64], index: 10, kind: input, shape index: {}]
  %s11 = inlined_call_operand.vmem [shape: f32[1,64], index: 11, kind: input, shape index: {}]
  %s12 = inlined_call_operand.vmem [shape: bf16[64,256], index: 12, kind: input, shape index: {}]
  %s13 = inlined_call_operand.vmem [shape: f32[1,256], index: 13, kind: input, shape index: {}]
  %s14 = inlined_call_operand.hbm [shape: f32[256,256], index: 14, kind: output, shape index: {0}]
  %s15 = inlined_call_operand.vmem [shape: f32[256,256], index: 15, kind: output, shape index: {1}]
  %16 = xla_tuple %s14, %s15
  %s17 = sld [smem:[#allocation0]]
  $region113: #{vae_forward.1} parent=0
    _
  %s19 = ssub.s32 1, %s17
  %s20 = scalar_select 0, %s19, %s17
  $region1: #{vae_forward.1} parent=0
    #allocation2 [shape = 'u8[262144]{0}', space=vmem, size = 0x40000, scoped, tag = 'input window, operand 0']
    #allocation3 [shape = 's32[2]{0}', space=sflag, size = 0x8, scoped, tag = 'scoped memory for vae_forward.1']
    #allocation4 [shape = 's32[2]{0}', space=sflag, size = 0x8, scoped, tag = 'scoped memory for vae_forward.1']
    #allocation5 [shape = 'u8[512]{0}', space=vmem, size = 0x400, scoped, tag = 'input window, operand 3, single buffered']
    #allocation6 [shape = 's32[1]{0}', space=sflag, size = 0x4, scoped, tag = 'scoped memory for vae_forward.1']
    #allocation7 [shape = 'u8[512]{0}', space=vmem, size = 0x400, scoped, tag = 'input window, operand 5, single buffered']
    #allocation8 [shape = 'u8[8192]{0}', space=vmem, size = 0x2000, scoped, tag = 'input window, operand 6, single buffered']
    #allocation9 [shape = 's32[1]{0}', space=sflag, size = 0x4, scoped, tag = 'scoped memory for vae_forward.1']
    #allocation10 [shape = 'u8[262144]{0}', space=vmem, size = 0x40000, scoped, tag = 'output window, operand 0']
    %21 = vsyncpa [#allocation3], 0
    %s22 = scalar_lea.sflag [#allocation3], 1
    %23 = vsyncpa %s22, 0
    %24 = vsyncpa [#allocation6], 0
    %25 = vsyncpa [#allocation9], 0
    %26 = vsyncpa [#allocation4], 0
    %s27 = scalar_lea.sflag [#allocation4], 1
    %28 = vsyncpa %s27, 0
    loop: start=0, step=1, limit=4
    $region2: #{vae_forward.1} parent=1 // loop_pre_header
      _
    $region3: #{vae_forward.1} parent=1 // loop_header
      %s30 = sphi 0, %s34
      %p31 = scmp.ge.s32.totalorder %s30, 4
      %s40 = sphi 0, %s42
      %s43 = sphi 0, %s40
      %s44 = sphi 0, %s43
      %s60 = sphi 0, %s44
      %s66 = sphi 0, %s68
      %s69 = sphi 0, %s66
      %s70 = sphi 0, %s69
      %s86 = sphi 0, %s70
      %s90 = sphi 0, %s90
      %s92 = sphi 0, %s90
      %s93 = sphi 0, %s92
      %s107 = sphi 0, %s93
      %s111 = sphi 0, %s111
      %s113 = sphi 0, %s111
      %s114 = sphi 0, %s113
      %s128 = sphi 0, %s114
      %s132 = sphi 0, %s132
      %s134 = sphi 0, %s132
      %s135 = sphi 0, %s134
      %s149 = sphi 0, %s135
      %s153 = sphi 0, %s153
      %s155 = sphi 0, %s153
      %s156 = sphi 0, %s155
      %s170 = sphi 0, %s156
      %s174 = sphi 0, %s174
      %s176 = sphi 0, %s174
      %s177 = sphi 0, %s176
      %s191 = sphi 0, %s177
      %s195 = sphi 0, %s195
      %s197 = sphi 0, %s195
      %s198 = sphi 0, %s197
      %s212 = sphi 0, %s198
      %s216 = sphi 0, %s216
      %s218 = sphi 0, %s216
      %s219 = sphi 0, %s218
      %s233 = sphi 0, %s219
      %s237 = sphi 0, %s237
      %s239 = sphi 0, %s237
      %s240 = sphi 0, %s239
      %s254 = sphi 0, %s240
      %s258 = sphi 0, %s258
      %s260 = sphi 0, %s258
      %s261 = sphi 0, %s260
      %s275 = sphi 0, %s261
      %s279 = sphi 0, %s279
      %s281 = sphi 0, %s279
      %s282 = sphi 0, %s281
      %s296 = sphi 0, %s282
      %s300 = sphi 0, %s300
      %s302 = sphi 0, %s300
      %s303 = sphi 0, %s302
      %s317 = sphi 0, %s303
      %s321 = sphi 0, %s321
      %s323 = sphi 0, %s321
      %s324 = sphi 0, %s323
      %s338 = sphi 0, %s324
      %s344 = sphi 0, %s346
      %s347 = sphi 0, %s344
      %s348 = sphi 0, %s347
      %s364 = sphi 0, %s348
      %s370 = sphi 0, %s372
      %s373 = sphi 0, %s370
      %s374 = sphi 0, %s373
      %s390 = sphi 0, %s374
    $region4: #{vae_forward.1} parent=1 // loop_header_branch
      %33 = sbr.rel (%p31) target = $region8
    $region5: #{vae_forward.1} parent=1 // loop_body
      %s35 = ssub.s32 %s30, 1
      %s36 = ssub.s32 %s30, 2
      %s37 = sadd.s32 %s30, 1
      %s38 = ssub.s32 %s30, %s37
      %p39 = scmp.eq.s32.totalorder %s38, 0
      %s41 = sadd.s32 %s40, 1
      %s42 = scalar_select %p39, %s40, %s41
      %p45 = pneg %p39
      %p46 = scmp.eq.s32.totalorder %s30, 1
      %p47 = por %p45, %p46
      %p48 = scmp.ne.s32.totalorder %s40, %s43
      %p49 = scmp.eq.s32.totalorder %s30, 0
      %p50 = por %p48, %p49
      %p51 = scmp.ne.s32.totalorder %s40, %s43
      %p52 = scmp.eq.s32.totalorder %s35, 1
      %p53 = por %p51, %p52
      %p54 = scmp.ne.s32.totalorder %s43, %s44
      %p55 = scmp.eq.s32.totalorder %s35, 0
      %p56 = por %p54, %p55
      %p57 = scmp.ne.s32.totalorder %s43, %s44
      %p58 = scmp.eq.s32.totalorder %s36, 1
      %p59 = por %p57, %p58
      %p61 = scmp.ne.s32.totalorder %s44, %s60
      %p62 = scmp.eq.s32.totalorder %s36, 0
      %p63 = por %p61, %p62
      %s64 = ssub.s32 %s30, %s37
      %p65 = scmp.eq.s32.totalorder %s64, 0
      %s67 = sadd.s32 %s66, 1
      %s68 = scalar_select %p65, %s66, %s67
      %p71 = pneg %p65
      %p72 = scmp.eq.s32.totalorder %s30, 1
      %p73 = por %p71, %p72
      %p74 = scmp.ne.s32.totalorder %s66, %s69
      %p75 = scmp.eq.s32.totalorder %s30, 0
      %p76 = por %p74, %p75
      %p77 = scmp.ne.s32.totalorder %s66, %s69
      %p78 = scmp.eq.s32.totalorder %s35, 1
      %p79 = por %p77, %p78
      %p80 = scmp.ne.s32.totalorder %s69, %s70
      %p81 = scmp.eq.s32.totalorder %s35, 0
      %p82 = por %p80, %p81
      %p83 = scmp.ne.s32.totalorder %s69, %s70
      %p84 = scmp.eq.s32.totalorder %s36, 1
      %p85 = por %p83, %p84
      %p87 = scmp.ne.s32.totalorder %s70, %s86
      %p88 = scmp.eq.s32.totalorder %s36, 0
      %p89 = por %p87, %p88
      %s91 = sadd.s32 %s90, 1
      %p94 = scmp.eq.s32.totalorder %s30, 1
      %p95 = scmp.ne.s32.totalorder %s90, %s92
      %p96 = scmp.eq.s32.totalorder %s30, 0
      %p97 = por %p95, %p96
      %p98 = scmp.ne.s32.totalorder %s90, %s92
      %p99 = scmp.eq.s32.totalorder %s35, 1
      %p100 = por %p98, %p99
      %p101 = scmp.ne.s32.totalorder %s92, %s93
      %p102 = scmp.eq.s32.totalorder %s35, 0
      %p103 = por %p101, %p102
      %p104 = scmp.ne.s32.totalorder %s92, %s93
      %p105 = scmp.eq.s32.totalorder %s36, 1
      %p106 = por %p104, %p105
      %p108 = scmp.ne.s32.totalorder %s93, %s107
      %p109 = scmp.eq.s32.totalorder %s36, 0
      %p110 = por %p108, %p109
      %s112 = sadd.s32 %s111, 1
      %p115 = scmp.eq.s32.totalorder %s30, 1
      %p116 = scmp.ne.s32.totalorder %s111, %s113
      %p117 = scmp.eq.s32.totalorder %s30, 0
      %p118 = por %p116, %p117
      %p119 = scmp.ne.s32.totalorder %s111, %s113
      %p120 = scmp.eq.s32.totalorder %s35, 1
      %p121 = por %p119, %p120
      %p122 = scmp.ne.s32.totalorder %s113, %s114
      %p123 = scmp.eq.s32.totalorder %s35, 0
      %p124 = por %p122, %p123
      %p125 = scmp.ne.s32.totalorder %s113, %s114
      %p126 = scmp.eq.s32.totalorder %s36, 1
      %p127 = por %p125, %p126
      %p129 = scmp.ne.s32.totalorder %s114, %s128
      %p130 = scmp.eq.s32.totalorder %s36, 0
      %p131 = por %p129, %p130
      %s133 = sadd.s32 %s132, 1
      %p136 = scmp.eq.s32.totalorder %s30, 1
      %p137 = scmp.ne.s32.totalorder %s132, %s134
      %p138 = scmp.eq.s32.totalorder %s30, 0
      %p139 = por %p137, %p138
      %p140 = scmp.ne.s32.totalorder %s132, %s134
      %p141 = scmp.eq.s32.totalorder %s35, 1
      %p142 = por %p140, %p141
      %p143 = scmp.ne.s32.totalorder %s134, %s135
      %p144 = scmp.eq.s32.totalorder %s35, 0
      %p145 = por %p143, %p144
      %p146 = scmp.ne.s32.totalorder %s134, %s135
      %p147 = scmp.eq.s32.totalorder %s36, 1
      %p148 = por %p146, %p147
      %p150 = scmp.ne.s32.totalorder %s135, %s149
      %p151 = scmp.eq.s32.totalorder %s36, 0
      %p152 = por %p150, %p151
      %s154 = sadd.s32 %s153, 1
      %p157 = scmp.eq.s32.totalorder %s30, 1
      %p158 = scmp.ne.s32.totalorder %s153, %s155
      %p159 = scmp.eq.s32.totalorder %s30, 0
      %p160 = por %p158, %p159
      %p161 = scmp.ne.s32.totalorder %s153, %s155
      %p162 = scmp.eq.s32.totalorder %s35, 1
      %p163 = por %p161, %p162
      %p164 = scmp.ne.s32.totalorder %s155, %s156
      %p165 = scmp.eq.s32.totalorder %s35, 0
      %p166 = por %p164, %p165
      %p167 = scmp.ne.s32.totalorder %s155, %s156
      %p168 = scmp.eq.s32.totalorder %s36, 1
      %p169 = por %p167, %p168
      %p171 = scmp.ne.s32.totalorder %s156, %s170
      %p172 = scmp.eq.s32.totalorder %s36, 0
      %p173 = por %p171, %p172
      %s175 = sadd.s32 %s174, 1
      %p178 = scmp.eq.s32.totalorder %s30, 1
      %p179 = scmp.ne.s32.totalorder %s174, %s176
      %p180 = scmp.eq.s32.totalorder %s30, 0
      %p181 = por %p179, %p180
      %p182 = scmp.ne.s32.totalorder %s174, %s176
      %p183 = scmp.eq.s32.totalorder %s35, 1
      %p184 = por %p182, %p183
      %p185 = scmp.ne.s32.totalorder %s176, %s177
      %p186 = scmp.eq.s32.totalorder %s35, 0
      %p187 = por %p185, %p186
      %p188 = scmp.ne.s32.totalorder %s176, %s177
      %p189 = scmp.eq.s32.totalorder %s36, 1
      %p190 = por %p188, %p189
      %p192 = scmp.ne.s32.totalorder %s177, %s191
      %p193 = scmp.eq.s32.totalorder %s36, 0
      %p194 = por %p192, %p193
      %s196 = sadd.s32 %s195, 1
      %p199 = scmp.eq.s32.totalorder %s30, 1
      %p200 = scmp.ne.s32.totalorder %s195, %s197
      %p201 = scmp.eq.s32.totalorder %s30, 0
      %p202 = por %p200, %p201
      %p203 = scmp.ne.s32.totalorder %s195, %s197
      %p204 = scmp.eq.s32.totalorder %s35, 1
      %p205 = por %p203, %p204
      %p206 = scmp.ne.s32.totalorder %s197, %s198
      %p207 = scmp.eq.s32.totalorder %s35, 0
      %p208 = por %p206, %p207
      %p209 = scmp.ne.s32.totalorder %s197, %s198
      %p210 = scmp.eq.s32.totalorder %s36, 1
      %p211 = por %p209, %p210
      %p213 = scmp.ne.s32.totalorder %s198, %s212
      %p214 = scmp.eq.s32.totalorder %s36, 0
      %p215 = por %p213, %p214
      %s217 = sadd.s32 %s216, 1
      %p220 = scmp.eq.s32.totalorder %s30, 1
      %p221 = scmp.ne.s32.totalorder %s216, %s218
      %p222 = scmp.eq.s32.totalorder %s30, 0
      %p223 = por %p221, %p222
      %p224 = scmp.ne.s32.totalorder %s216, %s218
      %p225 = scmp.eq.s32.totalorder %s35, 1
      %p226 = por %p224, %p225
      %p227 = scmp.ne.s32.totalorder %s218, %s219
      %p228 = scmp.eq.s32.totalorder %s35, 0
      %p229 = por %p227, %p228
      %p230 = scmp.ne.s32.totalorder %s218, %s219
      %p231 = scmp.eq.s32.totalorder %s36, 1
      %p232 = por %p230, %p231
      %p234 = scmp.ne.s32.totalorder %s219, %s233
      %p235 = scmp.eq.s32.totalorder %s36, 0
      %p236 = por %p234, %p235
      %s238 = sadd.s32 %s237, 1
      %p241 = scmp.eq.s32.totalorder %s30, 1
      %p242 = scmp.ne.s32.totalorder %s237, %s239
      %p243 = scmp.eq.s32.totalorder %s30, 0
      %p244 = por %p242, %p243
      %p245 = scmp.ne.s32.totalorder %s237, %s239
      %p246 = scmp.eq.s32.totalorder %s35, 1
      %p247 = por %p245, %p246
      %p248 = scmp.ne.s32.totalorder %s239, %s240
      %p249 = scmp.eq.s32.totalorder %s35, 0
      %p250 = por %p248, %p249
      %p251 = scmp.ne.s32.totalorder %s239, %s240
      %p252 = scmp.eq.s32.totalorder %s36, 1
      %p253 = por %p251, %p252
      %p255 = scmp.ne.s32.totalorder %s240, %s254
      %p256 = scmp.eq.s32.totalorder %s36, 0
      %p257 = por %p255, %p256
      %s259 = sadd.s32 %s258, 1
      %p262 = scmp.eq.s32.totalorder %s30, 1
      %p263 = scmp.ne.s32.totalorder %s258, %s260
      %p264 = scmp.eq.s32.totalorder %s30, 0
      %p265 = por %p263, %p264
      %p266 = scmp.ne.s32.totalorder %s258, %s260
      %p267 = scmp.eq.s32.totalorder %s35, 1
      %p268 = por %p266, %p267
      %p269 = scmp.ne.s32.totalorder %s260, %s261
      %p270 = scmp.eq.s32.totalorder %s35, 0
      %p271 = por %p269, %p270
      %p272 = scmp.ne.s32.totalorder %s260, %s261
      %p273 = scmp.eq.s32.totalorder %s36, 1
      %p274 = por %p272, %p273
      %p276 = scmp.ne.s32.totalorder %s261, %s275
      %p277 = scmp.eq.s32.totalorder %s36, 0
      %p278 = por %p276, %p277
      %s280 = sadd.s32 %s279, 1
      %p283 = scmp.eq.s32.totalorder %s30, 1
      %p284 = scmp.ne.s32.totalorder %s279, %s281
      %p285 = scmp.eq.s32.totalorder %s30, 0
      %p286 = por %p284, %p285
      %p287 = scmp.ne.s32.totalorder %s279, %s281
      %p288 = scmp.eq.s32.totalorder %s35, 1
      %p289 = por %p287, %p288
      %p290 = scmp.ne.s32.totalorder %s281, %s282
      %p291 = scmp.eq.s32.totalorder %s35, 0
      %p292 = por %p290, %p291
      %p293 = scmp.ne.s32.totalorder %s281, %s282
      %p294 = scmp.eq.s32.totalorder %s36, 1
      %p295 = por %p293, %p294
      %p297 = scmp.ne.s32.totalorder %s282, %s296
      %p298 = scmp.eq.s32.totalorder %s36, 0
      %p299 = por %p297, %p298
      %s301 = sadd.s32 %s300, 1
      %p304 = scmp.eq.s32.totalorder %s30, 1
      %p305 = scmp.ne.s32.totalorder %s300, %s302
      %p306 = scmp.eq.s32.totalorder %s30, 0
      %p307 = por %p305, %p306
      %p308 = scmp.ne.s32.totalorder %s300, %s302
      %p309 = scmp.eq.s32.totalorder %s35, 1
      %p310 = por %p308, %p309
      %p311 = scmp.ne.s32.totalorder %s302, %s303
      %p312 = scmp.eq.s32.totalorder %s35, 0
      %p313 = por %p311, %p312
      %p314 = scmp.ne.s32.totalorder %s302, %s303
      %p315 = scmp.eq.s32.totalorder %s36, 1
      %p316 = por %p314, %p315
      %p318 = scmp.ne.s32.totalorder %s303, %s317
      %p319 = scmp.eq.s32.totalorder %s36, 0
      %p320 = por %p318, %p319
      %s322 = sadd.s32 %s321, 1
      %p325 = scmp.eq.s32.totalorder %s30, 1
      %p326 = scmp.ne.s32.totalorder %s321, %s323
      %p327 = scmp.eq.s32.totalorder %s30, 0
      %p328 = por %p326, %p327
      %p329 = scmp.ne.s32.totalorder %s321, %s323
      %p330 = scmp.eq.s32.totalorder %s35, 1
      %p331 = por %p329, %p330
      %p332 = scmp.ne.s32.totalorder %s323, %s324
      %p333 = scmp.eq.s32.totalorder %s35, 0
      %p334 = por %p332, %p333
      %p335 = scmp.ne.s32.totalorder %s323, %s324
      %p336 = scmp.eq.s32.totalorder %s36, 1
      %p337 = por %p335, %p336
      %p339 = scmp.ne.s32.totalorder %s324, %s338
      %p340 = scmp.eq.s32.totalorder %s36, 0
      %p341 = por %p339, %p340
      %s342 = ssub.s32 %s30, %s37
      %p343 = scmp.eq.s32.totalorder %s342, 0
      %s345 = sadd.s32 %s344, 1
      %s346 = scalar_select %p343, %s344, %s345
      %p349 = pneg %p343
      %p350 = scmp.eq.s32.totalorder %s30, 1
      %p351 = por %p349, %p350
      %p352 = scmp.ne.s32.totalorder %s344, %s347
      %p353 = scmp.eq.s32.totalorder %s30, 0
      %p354 = por %p352, %p353
      %p355 = scmp.ne.s32.totalorder %s344, %s347
      %p356 = scmp.eq.s32.totalorder %s35, 1
      %p357 = por %p355, %p356
      %p358 = scmp.ne.s32.totalorder %s347, %s348
      %p359 = scmp.eq.s32.totalorder %s35, 0
      %p360 = por %p358, %p359
      %p361 = scmp.ne.s32.totalorder %s347, %s348
      %p362 = scmp.eq.s32.totalorder %s36, 1
      %p363 = por %p361, %p362
      %p365 = scmp.ne.s32.totalorder %s348, %s364
      %p366 = scmp.eq.s32.totalorder %s36, 0
      %p367 = por %p365, %p366
      %s368 = ssub.s32 %s30, %s37
      %p369 = scmp.eq.s32.totalorder %s368, 0
      %s371 = sadd.s32 %s370, 1
      %s372 = scalar_select %p369, %s370, %s371
      %p375 = pneg %p369
      %p376 = scmp.eq.s32.totalorder %s30, 1
      %p377 = por %p375, %p376
      %p378 = scmp.ne.s32.totalorder %s370, %s373
      %p379 = scmp.eq.s32.totalorder %s30, 0
      %p380 = por %p378, %p379
      %p381 = scmp.ne.s32.totalorder %s370, %s373
      %p382 = scmp.eq.s32.totalorder %s35, 1
      %p383 = por %p381, %p382
      %p384 = scmp.ne.s32.totalorder %s373, %s374
      %p385 = scmp.eq.s32.totalorder %s35, 0
      %p386 = por %p384, %p385
      %p387 = scmp.ne.s32.totalorder %s373, %s374
      %p388 = scmp.eq.s32.totalorder %s36, 1
      %p389 = por %p387, %p388
      %p391 = scmp.ne.s32.totalorder %s374, %s390
      %p392 = scmp.eq.s32.totalorder %s36, 0
      %p393 = por %p391, %p392
      %p394 = scmp.le.s32.totalorder 1, %s30
      %p395 = scmp.lt.s32.totalorder %s30, 3
      %p396 = pnand %p394, %p395
      %p397 = pneg %p396
      // Predicated region
      $region9: #{vae_forward.1} parent=5 // pred_check
        _
      $region10: #{vae_forward.1} parent=5 // pred_check_branch
        %399 = sbr.rel (%p396) target = $region12
      $region11: #{vae_forward.1} parent=5 // pred_region
        %s400 = ssub.s32 %s30, 1
        // Predicated region
        $region13: #{vae_forward.1} parent=11 // pred_check
          %p401 = pneg %p103
        $region14: #{vae_forward.1} parent=11 // pred_check_branch
          %403 = sbr.rel (%p401) target = $region16
        $region15: #{vae_forward.1} parent=11 // pred_region
          _
        $region16: #{vae_forward.1} parent=11 // pred_fallthru
          _
        // Predicated region
        $region17: #{vae_forward.1} parent=11 // pred_check
          %p404 = pneg %p124
        $region18: #{vae_forward.1} parent=11 // pred_check_branch
          %406 = sbr.rel (%p404) target = $region20
        $region19: #{vae_forward.1} parent=11 // pred_region
          %s408 = ssub.s32 16, 16
          %409 = vsyncadd [#allocation6], %s408
          %s411 = sshll.u32 [#allocation5], 4
          %s412 = int_to_ptr.vmem [resolvable:$true] %s411
          %414 = dma.hbm_to_vmem [thread:$0]  %s3, 16, %s412, [#allocation6]
        $region20: #{vae_forward.1} parent=11 // pred_fallthru
          _
        // Predicated region
        $region21: #{vae_forward.1} parent=11 // pred_check
          %p415 = pneg %p145
        $region22: #{vae_forward.1} parent=11 // pred_check_branch
          %417 = sbr.rel (%p415) target = $region24
        $region23: #{vae_forward.1} parent=11 // pred_region
          _
        $region24: #{vae_forward.1} parent=11 // pred_fallthru
          _
        // Predicated region
        $region25: #{vae_forward.1} parent=11 // pred_check
          %p418 = pneg %p166
        $region26: #{vae_forward.1} parent=11 // pred_check_branch
          %420 = sbr.rel (%p418) target = $region28
        $region27: #{vae_forward.1} parent=11 // pred_region
          %s422 = ssub.s32 16, 16
          %423 = vsyncadd [#allocation6], %s422
          %s425 = sshll.u32 [#allocation7], 4
          %s426 = int_to_ptr.vmem [resolvable:$true] %s425
          %428 = dma.hbm_to_vmem [thread:$0]  %s5, 16, %s426, [#allocation6]
        $region28: #{vae_forward.1} parent=11 // pred_fallthru
          _
        // Predicated region
        $region29: #{vae_forward.1} parent=11 // pred_check
          %p429 = pneg %p187
        $region30: #{vae_forward.1} parent=11 // pred_check_branch
          %431 = sbr.rel (%p429) target = $region32
        $region31: #{vae_forward.1} parent=11 // pred_region
          %s433 = ssub.s32 256, 256
          %434 = vsyncadd [#allocation9], %s433
          %s435 = sshll.u32 [#allocation8], 4
          %s436 = int_to_ptr.vmem [resolvable:$true] %s435
          %441 = dma.hbm_to_vmem [thread:$0]  %s6, 256, %s436, [#allocation9], 128, 128, 8
        $region32: #{vae_forward.1} parent=11 // pred_fallthru
          _
        // Predicated region
        $region33: #{vae_forward.1} parent=11 // pred_check
          %p442 = pneg %p208
        $region34: #{vae_forward.1} parent=11 // pred_check_branch
          %444 = sbr.rel (%p442) target = $region36
        $region35: #{vae_forward.1} parent=11 // pred_region
          _
        $region36: #{vae_forward.1} parent=11 // pred_fallthru
          _
        // Predicated region
        $region37: #{vae_forward.1} parent=11 // pred_check
          %p445 = pneg %p229
        $region38: #{vae_forward.1} parent=11 // pred_check_branch
          %447 = sbr.rel (%p445) target = $region40
        $region39: #{vae_forward.1} parent=11 // pred_region
          _
        $region40: #{vae_forward.1} parent=11 // pred_fallthru
          _
        // Predicated region
        $region41: #{vae_forward.1} parent=11 // pred_check
          %p448 = pneg %p250
        $region42: #{vae_forward.1} parent=11 // pred_check_branch
          %450 = sbr.rel (%p448) target = $region44
        $region43: #{vae_forward.1} parent=11 // pred_region
          _
        $region44: #{vae_forward.1} parent=11 // pred_fallthru
          _
        // Predicated region
        $region45: #{vae_forward.1} parent=11 // pred_check
          %p451 = pneg %p271
        $region46: #{vae_forward.1} parent=11 // pred_check_branch
          %453 = sbr.rel (%p451) target = $region48
        $region47: #{vae_forward.1} parent=11 // pred_region
          _
        $region48: #{vae_forward.1} parent=11 // pred_fallthru
          _
        // Predicated region
        $region49: #{vae_forward.1} parent=11 // pred_check
          %p454 = pneg %p292
        $region50: #{vae_forward.1} parent=11 // pred_check_branch
          %456 = sbr.rel (%p454) target = $region52
        $region51: #{vae_forward.1} parent=11 // pred_region
          _
        $region52: #{vae_forward.1} parent=11 // pred_fallthru
          _
        // Predicated region
        $region53: #{vae_forward.1} parent=11 // pred_check
          %p457 = pneg %p313
        $region54: #{vae_forward.1} parent=11 // pred_check_branch
          %459 = sbr.rel (%p457) target = $region56
        $region55: #{vae_forward.1} parent=11 // pred_region
          _
        $region56: #{vae_forward.1} parent=11 // pred_fallthru
          _
        // Predicated region
        $region57: #{vae_forward.1} parent=11 // pred_check
          %p460 = pneg %p334
        $region58: #{vae_forward.1} parent=11 // pred_check_branch
          %462 = sbr.rel (%p460) target = $region60
        $region59: #{vae_forward.1} parent=11 // pred_region
          _
        $region60: #{vae_forward.1} parent=11 // pred_fallthru
          _
      $region12: #{vae_forward.1} parent=5 // pred_fallthru
        _
      %p463 = scmp.lt.s32.totalorder %s30, 2
      // Predicated region
      $region61: #{vae_forward.1} parent=5 // pred_check
        %p464 = pneg %p463
      $region62: #{vae_forward.1} parent=5 // pred_check_branch
        %466 = sbr.rel (%p464) target = $region64
      $region63: #{vae_forward.1} parent=5 // pred_region
        // Predicated region
        $region65: #{vae_forward.1} parent=63 // pred_check
          %p467 = pneg %p50
        $region66: #{vae_forward.1} parent=63 // pred_check_branch
          %469 = sbr.rel (%p467) target = $region68
        $region67: #{vae_forward.1} parent=63 // pred_region
          %s470 = sand.u32 %s40, 1
          %s471 = scalar_lea.sflag [#allocation3], %s470
          %s472 = sand.u32 %s40, 1
          %s473 = smul.addr %s472, 256
          %s474 = scalar_lea.vmem [#allocation2], %s473
          %s475 = smul.u32 16, %s30
          %s477 = ssub.s32 4096, 4096
          %478 = vsyncadd %s471, %s477
          %s479 = smul.addr %s475, 2
          %s480 = smul.addr %s479, 128
          %s481 = scalar_lea.hbm %s0, %s480
          %s482 = sshll.u32 %s474, 4
          %s483 = int_to_ptr.vmem [resolvable:$true] %s482
          %488 = dma.hbm_to_vmem [thread:$0]  %s481, 4096, %s483, %s471, 256, 256, 16
        $region68: #{vae_forward.1} parent=63 // pred_fallthru
          _
        // Predicated region
        $region69: #{vae_forward.1} parent=63 // pred_check
          %p489 = pneg %p76
        $region70: #{vae_forward.1} parent=63 // pred_check_branch
          %491 = sbr.rel (%p489) target = $region72
        $region71: #{vae_forward.1} parent=63 // pred_region
          %s492 = smul.u32 16, %s30
          %p493 = scmp.lt.s32.totalorder %s492, 31
          %s494 = scalar_select %p493, %s492, 31
          %s495 = smul.addr %s494, 8
          %s496 = scalar_lea.vmem %s1, %s495
          %s497 = smul.u32 16, %s30
        $region72: #{vae_forward.1} parent=63 // pred_fallthru
          _
      $region64: #{vae_forward.1} parent=5 // pred_fallthru
        _
      %p498 = scmp.le.s32.totalorder 1, %s30
      %p499 = scmp.lt.s32.totalorder %s30, 3
      %p500 = pnand %p498, %p499
      %p501 = pneg %p500
      // Predicated region
      $region73: #{vae_forward.1} parent=5 // pred_check
        _
      $region74: #{vae_forward.1} parent=5 // pred_check_branch
        %503 = sbr.rel (%p500) target = $region76
      $region75: #{vae_forward.1} parent=5 // pred_region
        %s504 = ssub.s32 %s30, 1
        %s505 = sand.u32 %s43, 1
        %s506 = scalar_lea.sflag [#allocation3], %s505
        %s507 = sand.u32 %s43, 1
        %s508 = smul.addr %s507, 256
        %s509 = scalar_lea.vmem [#allocation2], %s508
        // Predicated region
        $region77: #{vae_forward.1} parent=75 // pred_check
          %p510 = pneg %p56
        $region78: #{vae_forward.1} parent=75 // pred_check_branch
          %512 = sbr.rel (%p510) target = $region80
        $region79: #{vae_forward.1} parent=75 // pred_region
          %513 = dma.done %s506, 4096
        $region80: #{vae_forward.1} parent=75 // pred_fallthru
          _
        // Predicated region
        $region81: #{vae_forward.1} parent=75 // pred_check
          %p514 = pneg %p124
        $region82: #{vae_forward.1} parent=75 // pred_check_branch
          %516 = sbr.rel (%p514) target = $region84
        $region83: #{vae_forward.1} parent=75 // pred_region
          %517 = dma.done [#allocation6], 16
        $region84: #{vae_forward.1} parent=75 // pred_fallthru
          _
        // Predicated region
        $region85: #{vae_forward.1} parent=75 // pred_check
          %p518 = pneg %p166
        $region86: #{vae_forward.1} parent=75 // pred_check_branch
          %520 = sbr.rel (%p518) target = $region88
        $region87: #{vae_forward.1} parent=75 // pred_region
          %521 = dma.done [#allocation6], 16
        $region88: #{vae_forward.1} parent=75 // pred_fallthru
          _
        // Predicated region
        $region89: #{vae_forward.1} parent=75 // pred_check
          %p522 = pneg %p187
        $region90: #{vae_forward.1} parent=75 // pred_check_branch
          %524 = sbr.rel (%p522) target = $region92
        $region91: #{vae_forward.1} parent=75 // pred_region
          %525 = dma.done [#allocation9], 256
        $region92: #{vae_forward.1} parent=75 // pred_fallthru
          _
        %s526 = sand.u32 %s43, 1
        %s527 = scalar_lea.sflag [#allocation3], %s526
        %s528 = sand.u32 %s43, 1
        %s529 = smul.addr %s528, 256
        %s530 = scalar_lea.vmem [#allocation2], %s529
        %p531 = pneg %p56
        %p532 = pneg %p53
        %s533 = smul.u32 16, %s35
        %p534 = scmp.lt.s32.totalorder %s533, 31
        %s535 = scalar_select %p534, %s533, 31
        %s536 = smul.addr %s535, 8
        %s537 = scalar_lea.vmem %s1, %s536
        %p538 = pneg %p82
        %p539 = pneg %p79
        %p540 = pneg %p103
        %p541 = pneg %p100
        %p542 = pneg %p124
        %p543 = pneg %p121
        %p544 = pneg %p145
        %p545 = pneg %p142
        %p546 = pneg %p166
        %p547 = pneg %p163
        %p548 = pneg %p187
        %p549 = pneg %p184
        %p550 = pneg %p208
        %p551 = pneg %p205
        %p552 = pneg %p229
        %p553 = pneg %p226
        %p554 = pneg %p250
        %p555 = pneg %p247
        %p556 = pneg %p271
        %p557 = pneg %p268
        %p558 = pneg %p292
        %p559 = pneg %p289
        %p560 = pneg %p313
        %p561 = pneg %p310
        %p562 = pneg %p334
        %p563 = pneg %p331
        %p564 = pneg %p360
        %p565 = pneg %p357
        %s566 = sand.u32 %s347, 1
        %s567 = scalar_lea.sflag [#allocation4], %s566
        %s568 = sand.u32 %s347, 1
        %s569 = smul.addr %s568, 256
        %s570 = scalar_lea.vmem [#allocation10], %s569
        %p571 = pneg %p386
        %p572 = pneg %p383
        %s573 = smul.u32 16, %s35
        %p574 = scmp.lt.s32.totalorder %s573, 31
        %s575 = scalar_select %p574, %s573, 31
        %s576 = smul.addr %s575, 2
        %s577 = smul.addr %s576, 8
        %s578 = scalar_lea.vmem %s15, %s577
        %s579 = smul.u32 16, %s35
        %s580 = smul.u32 16, %s35
        %p581 = scmp.lt.s32.totalorder %s580, 31
        %s582 = scalar_select %p581, %s580, 31
        %s583 = smul.addr %s582, 8
        %s584 = scalar_lea.vmem %s1, %s583
        %s585 = smul.u32 16, %s35
        %s586 = smul.u32 16, %s35
        %s587 = smul.u32 16, %s35
        %p588 = scmp.lt.s32.totalorder %s587, 31
        %s589 = scalar_select %p588, %s587, 31
        %s590 = smul.addr %s589, 2
        %s591 = smul.addr %s590, 8
        %s592 = scalar_lea.vmem %s15, %s591
        %s593 = smul.u32 16, %s35
        %v595 = vld [vmem:[%s509] sm:$0xff]
        %v596 = vld [vmem:[%s509 + $0x8] sm:$0xff]
        %v597 = vld [vmem:[%s509 + $0x10] sm:$0xff]
        %v598 = vld [vmem:[%s509 + $0x18] sm:$0xff]
        %v599 = vld [vmem:[%s509 + $0x20] sm:$0xff]
        %v600 = vld [vmem:[%s509 + $0x28] sm:$0xff]
        %v601 = vld [vmem:[%s509 + $0x30] sm:$0xff]
        %v602 = vld [vmem:[%s509 + $0x38] sm:$0xff]
        %v603 = vld [vmem:[%s509 + $0x40] sm:$0xff]
        %v604 = vld [vmem:[%s509 + $0x48] sm:$0xff]
        %v605 = vld [vmem:[%s509 + $0x50] sm:$0xff]
        %v606 = vld [vmem:[%s509 + $0x58] sm:$0xff]
        %v607 = vld [vmem:[%s509 + $0x60] sm:$0xff]
        %v608 = vld [vmem:[%s509 + $0x68] sm:$0xff]
        %v609 = vld [vmem:[%s509 + $0x70] sm:$0xff]
        %v610 = vld [vmem:[%s509 + $0x78] sm:$0xff]
        %v611 = vld [vmem:[%s509 + $0x80] sm:$0xff]
        %v612 = vld [vmem:[%s509 + $0x88] sm:$0xff]
        %v613 = vld [vmem:[%s509 + $0x90] sm:$0xff]
        %v614 = vld [vmem:[%s509 + $0x98] sm:$0xff]
        %v615 = vld [vmem:[%s509 + $0xa0] sm:$0xff]
        %v616 = vld [vmem:[%s509 + $0xa8] sm:$0xff]
        %v617 = vld [vmem:[%s509 + $0xb0] sm:$0xff]
        %v618 = vld [vmem:[%s509 + $0xb8] sm:$0xff]
        %v619 = vld [vmem:[%s509 + $0xc0] sm:$0xff]
        %v620 = vld [vmem:[%s509 + $0xc8] sm:$0xff]
        %v621 = vld [vmem:[%s509 + $0xd0] sm:$0xff]
        %v622 = vld [vmem:[%s509 + $0xd8] sm:$0xff]
        %v623 = vld [vmem:[%s509 + $0xe0] sm:$0xff]
        %v624 = vld [vmem:[%s509 + $0xe8] sm:$0xff]
        %v625 = vld [vmem:[%s509 + $0xf0] sm:$0xff]
        %v626 = vld [vmem:[%s509 + $0xf8] sm:$0xff]
        %v627 = vpack.c.bf16 %v597, %v595
        %v628 = vpack.c.bf16 %v598, %v596
        %v629 = vpack.c.bf16 %v601, %v599
        %v630 = vpack.c.bf16 %v602, %v600
        %v631 = vpack.c.bf16 %v605, %v603
        %v632 = vpack.c.bf16 %v606, %v604
        %v633 = vpack.c.bf16 %v609, %v607
        %v634 = vpack.c.bf16 %v610, %v608
        %v635 = vpack.c.bf16 %v613, %v611
        %v636 = vpack.c.bf16 %v614, %v612
        %v637 = vpack.c.bf16 %v617, %v615
        %v638 = vpack.c.bf16 %v618, %v616
        %v639 = vpack.c.bf16 %v621, %v619
        %v640 = vpack.c.bf16 %v622, %v620
        %v641 = vpack.c.bf16 %v625, %v623
        %v642 = vpack.c.bf16 %v626, %v624
        %v643 = vld [vmem:[%s2] sm:$0xf]
        %v644 = vld [vmem:[%s2 + $0x4] sm:$0xf]
        %v645 = vld [vmem:[%s2 + $0x8] sm:$0xf]
        %v646 = vld [vmem:[%s2 + $0xc] sm:$0xf]
        %v647 = vld [vmem:[%s2 + $0x10] sm:$0xf]
        %v648 = vld [vmem:[%s2 + $0x14] sm:$0xf]
        %v649 = vld [vmem:[%s2 + $0x18] sm:$0xf]
        %v650 = vld [vmem:[%s2 + $0x1c] sm:$0xf]
        %v651 = vld [vmem:[%s2 + $0x20] sm:$0xf]
        %v652 = vld [vmem:[%s2 + $0x24] sm:$0xf]
        %v653 = vld [vmem:[%s2 + $0x28] sm:$0xf]
        %v654 = vld [vmem:[%s2 + $0x2c] sm:$0xf]
        %v655 = vld [vmem:[%s2 + $0x30] sm:$0xf]
        %v656 = vld [vmem:[%s2 + $0x34] sm:$0xf]
        %v657 = vld [vmem:[%s2 + $0x38] sm:$0xf]
        %v658 = vld [vmem:[%s2 + $0x3c] sm:$0xf]
        %v659 = vld [vmem:[%s2 + $0x40] sm:$0xf]
        %v660 = vld [vmem:[%s2 + $0x44] sm:$0xf]
        %v661 = vld [vmem:[%s2 + $0x48] sm:$0xf]
        %v662 = vld [vmem:[%s2 + $0x4c] sm:$0xf]
        %v663 = vld [vmem:[%s2 + $0x50] sm:$0xf]
        %v664 = vld [vmem:[%s2 + $0x54] sm:$0xf]
        %v665 = vld [vmem:[%s2 + $0x58] sm:$0xf]
        %v666 = vld [vmem:[%s2 + $0x5c] sm:$0xf]
        %v667 = vld [vmem:[%s2 + $0x60] sm:$0xf]
        %v668 = vld [vmem:[%s2 + $0x64] sm:$0xf]
        %v669 = vld [vmem:[%s2 + $0x68] sm:$0xf]
        %v670 = vld [vmem:[%s2 + $0x6c] sm:$0xf]
        %v671 = vld [vmem:[%s2 + $0x70] sm:$0xf]
        %v672 = vld [vmem:[%s2 + $0x74] sm:$0xf]
        %v673 = vld [vmem:[%s2 + $0x78] sm:$0xf]
        %v674 = vld [vmem:[%s2 + $0x7c] sm:$0xf]
        %v675 = vld [vmem:[#allocation5] sm:$0x1]
        %v677 = vlaneseq
        %v678 = vshrl.u32 %v677, 7
        %v679 = vsub.s32 0, %v678
        %v680 = vrot.slane %v675, %v679
        %v714 = vunpack.c.l.b16 %v643
        %v715 = vunpack.c.l.b16 %v644
        %v716 = vunpack.c.l.b16 %v645
        %v717 = vunpack.c.l.b16 %v646
        %v718 = vunpack.c.l.b16 %v647
        %v719 = vunpack.c.l.b16 %v648
        %v720 = vunpack.c.l.b16 %v649
        %v721 = vunpack.c.l.b16 %v650
        %v722 = vunpack.c.l.b16 %v651
        %v723 = vunpack.c.l.b16 %v652
        %v724 = vunpack.c.l.b16 %v653
        %v725 = vunpack.c.l.b16 %v654
        %v726 = vunpack.c.l.b16 %v655
        %v727 = vunpack.c.l.b16 %v656
        %v728 = vunpack.c.l.b16 %v657
        %v729 = vunpack.c.l.b16 %v658
        %v730 = vunpack.c.l.b16 %v659
        %v731 = vunpack.c.l.b16 %v660
        %v732 = vunpack.c.l.b16 %v661
        %v733 = vunpack.c.l.b16 %v662
        %v734 = vunpack.c.l.b16 %v663
        %v735 = vunpack.c.l.b16 %v664
        %v736 = vunpack.c.l.b16 %v665
        %v737 = vunpack.c.l.b16 %v666
        %v738 = vunpack.c.l.b16 %v667
        %v739 = vunpack.c.l.b16 %v668
        %v740 = vunpack.c.l.b16 %v669
        %v741 = vunpack.c.l.b16 %v670
        %v742 = vunpack.c.l.b16 %v671
        %v743 = vunpack.c.l.b16 %v672
        %v744 = vunpack.c.l.b16 %v673
        %v745 = vunpack.c.l.b16 %v674
        %v746 = vpack.c.b16 %v715, %v714
        %v747 = vpack.c.b16 %v717, %v716
        %v748 = vpack.c.b16 %v719, %v718
        %v749 = vpack.c.b16 %v721, %v720
        %v750 = vpack.c.b16 %v723, %v722
        %v751 = vpack.c.b16 %v725, %v724
        %v752 = vpack.c.b16 %v727, %v726
        %v753 = vpack.c.b16 %v729, %v728
        %v754 = vpack.c.b16 %v731, %v730
        %v755 = vpack.c.b16 %v733, %v732
        %v756 = vpack.c.b16 %v735, %v734
        %v757 = vpack.c.b16 %v737, %v736
        %v758 = vpack.c.b16 %v739, %v738
        %v759 = vpack.c.b16 %v741, %v740
        %v760 = vpack.c.b16 %v743, %v742
        %v761 = vpack.c.b16 %v745, %v744
        %778 = vmatprep.subr.bf16.mxu0 0
        %779 = vmatpush1.bf16.msra.mxu0 %v746
        %780 = vmatprep.subr.bf16.mxu0 0
        %781 = vmatpush1.bf16.msra.mxu0 %v747
        %782 = vmatprep.subr.bf16.mxu0 0
        %783 = vmatpush1.bf16.msra.mxu0 %v748
        %784 = vmatprep.subr.bf16.mxu0 0
        %785 = vmatpush1.bf16.msra.mxu0 %v749
        %786 = vmatprep.subr.bf16.mxu0 0
        %787 = vmatpush1.bf16.msra.mxu0 %v750
        %788 = vmatprep.subr.bf16.mxu0 0
        %789 = vmatpush1.bf16.msra.mxu0 %v751
        %790 = vmatprep.subr.bf16.mxu0 0
        %791 = vmatpush1.bf16.msra.mxu0 %v752
        %792 = vmatprep.subr.bf16.mxu0 0
        %793 = vmatpush1.bf16.msra.mxu0 %v753
        %794 = vmatprep.subr.bf16.mxu0 0
        %795 = vmatpush1.bf16.msra.mxu0 %v754
        %796 = vmatprep.subr.bf16.mxu0 0
        %797 = vmatpush1.bf16.msra.mxu0 %v755
        %798 = vmatprep.subr.bf16.mxu0 0
        %799 = vmatpush1.bf16.msra.mxu0 %v756
        %800 = vmatprep.subr.bf16.mxu0 0
        %801 = vmatpush1.bf16.msra.mxu0 %v757
        %802 = vmatprep.subr.bf16.mxu0 0
        %803 = vmatpush1.bf16.msra.mxu0 %v758
        %804 = vmatprep.subr.bf16.mxu0 0
        %805 = vmatpush1.bf16.msra.mxu0 %v759
        %806 = vmatprep.subr.bf16.mxu0 0
        %807 = vmatpush1.bf16.msra.mxu0 %v760
        %808 = vmatprep.subr.bf16.mxu0 0
        %809 = vmatpush1.bf16.msra.mxu0 %v761
        %810 = vmatprep.mubr.bf16.mxu0 %v628
        %811 = vmatmul.mubr.bf16.gmra.mrb[0].mxu0 %v627
        %v812 = vpop.f32.mrb[0].mxu0
        %v813 = vadd.f32 %v680, %v812
        %v814 = vpop.f32.mrb[0].mxu0
        %v815 = vpop.f32.mrb[0].mxu0
        %v816 = vadd.f32 %v680, %v815
        %v817 = vpop.f32.mrb[0].mxu0
        %818 = vmatprep.mubr.bf16.mxu0 %v630
        %819 = vmatmul.mubr.bf16.gmra.mrb[0].mxu0 %v629
        %v820 = vpop.f32.mrb[0].mxu0
        %v821 = vadd.f32 %v680, %v820
        %v822 = vpop.f32.mrb[0].mxu0
        %v823 = vpop.f32.mrb[0].mxu0
        %v824 = vadd.f32 %v680, %v823
        %v825 = vpop.f32.mrb[0].mxu0
        %826 = vmatprep.mubr.bf16.mxu0 %v632
        %827 = vmatmul.mubr.bf16.gmra.mrb[0].mxu0 %v631
        %v828 = vpop.f32.mrb[0].mxu0
        %v829 = vadd.f32 %v680, %v828
        %v830 = vpop.f32.mrb[0].mxu0
        %v831 = vpop.f32.mrb[0].mxu0
        %v832 = vadd.f32 %v680, %v831
        %v833 = vpop.f32.mrb[0].mxu0
        %834 = vmatprep.mubr.bf16.mxu0 %v634
        %835 = vmatmul.mubr.bf16.gmra.mrb[0].mxu0 %v633
        %v836 = vpop.f32.mrb[0].mxu0
        %v837 = vadd.f32 %v680, %v836
        %v838 = vpop.f32.mrb[0].mxu0
        %v839 = vpop.f32.mrb[0].mxu0
        %v840 = vadd.f32 %v680, %v839
        %v841 = vpop.f32.mrb[0].mxu0
        %842 = vmatprep.mubr.bf16.mxu0 %v636
        %843 = vmatmul.mubr.bf16.gmra.mrb[0].mxu0 %v635
        %v844 = vpop.f32.mrb[0].mxu0
        %v845 = vadd.f32 %v680, %v844
        %v846 = vpop.f32.mrb[0].mxu0
        %v847 = vpop.f32.mrb[0].mxu0
        %v848 = vadd.f32 %v680, %v847
        %v849 = vpop.f32.mrb[0].mxu0
        %850 = vmatprep.mubr.bf16.mxu0 %v638
        %851 = vmatmul.mubr.bf16.gmra.mrb[0].mxu0 %v637
        %v852 = vpop.f32.mrb[0].mxu0
        %v853 = vadd.f32 %v680, %v852
        %v854 = vpop.f32.mrb[0].mxu0
        %v855 = vpop.f32.mrb[0].mxu0
        %v856 = vadd.f32 %v680, %v855
        %v857 = vpop.f32.mrb[0].mxu0
        %858 = vmatprep.mubr.bf16.mxu0 %v640
        %859 = vmatmul.mubr.bf16.gmra.mrb[0].mxu0 %v639
        %v860 = vpop.f32.mrb[0].mxu0
        %v861 = vadd.f32 %v680, %v860
        %v862 = vpop.f32.mrb[0].mxu0
        %v863 = vpop.f32.mrb[0].mxu0
        %v864 = vadd.f32 %v680, %v863
        %v865 = vpop.f32.mrb[0].mxu0
        %866 = vmatprep.mubr.bf16.mxu0 %v642
        %867 = vmatmul.mubr.bf16.gmra.mrb[0].mxu0 %v641
        %v868 = vpop.f32.mrb[0].mxu0
        %v869 = vadd.f32 %v680, %v868
        %v870 = vpop.f32.mrb[0].mxu0
        %v871 = vpop.f32.mrb[0].mxu0
        %v872 = vadd.f32 %v680, %v871
        %v873 = vpop.f32.mrb[0].mxu0
        %874 = vdwg.mxu0
        %v875 = vtanh.pop %v813
        %v876 = vtanh.pop %v816
        %v877 = vtanh.pop %v821
        %v878 = vtanh.pop %v824
        %v879 = vtanh.pop %v829
        %v880 = vtanh.pop %v832
        %v881 = vtanh.pop %v837
        %v882 = vtanh.pop %v840
        %v883 = vtanh.pop %v845
        %v884 = vtanh.pop %v848
        %v885 = vtanh.pop %v853
        %v886 = vtanh.pop %v856
        %v887 = vtanh.pop %v861
        %v888 = vtanh.pop %v864
        %v889 = vtanh.pop %v869
        %v890 = vtanh.pop %v872
        %v891 = vpack.c.bf16 %v876, %v875
        %v892 = vpack.c.bf16 %v878, %v877
        %v893 = vpack.c.bf16 %v880, %v879
        %v894 = vpack.c.bf16 %v882, %v881
        %v895 = vpack.c.bf16 %v884, %v883
        %v896 = vpack.c.bf16 %v886, %v885
        %v897 = vpack.c.bf16 %v888, %v887
        %v898 = vpack.c.bf16 %v890, %v889
        %v899 = vld [vmem:[%s4] sm:$0xf]
        %v900 = vld [vmem:[%s4 + $0x4] sm:$0xf]
        %v901 = vld [vmem:[%s4 + $0x8] sm:$0xf]
        %v902 = vld [vmem:[%s4 + $0xc] sm:$0xf]
        %v903 = vld [vmem:[%s4 + $0x10] sm:$0xf]
        %v904 = vld [vmem:[%s4 + $0x14] sm:$0xf]
        %v905 = vld [vmem:[%s4 + $0x18] sm:$0xf]
        %v906 = vld [vmem:[%s4 + $0x1c] sm:$0xf]
        %v907 = vld [vmem:[#allocation7] sm:$0x1]
        %v909 = vlaneseq
        %v910 = vshrl.u32 %v909, 7
        %v911 = vsub.s32 0, %v910
        %v912 = vrot.slane %v907, %v911
        %v922 = vunpack.c.l.b16 %v899
        %v923 = vunpack.c.l.b16 %v900
        %v924 = vunpack.c.l.b16 %v901
        %v925 = vunpack.c.l.b16 %v902
        %v926 = vunpack.c.l.b16 %v903
        %v927 = vunpack.c.l.b16 %v904
        %v928 = vunpack.c.l.b16 %v905
        %v929 = vunpack.c.l.b16 %v906
        %v930 = vpack.c.b16 %v923, %v922
        %v931 = vpack.c.b16 %v925, %v924
        %v932 = vpack.c.b16 %v927, %v926
        %v933 = vpack.c.b16 %v929, %v928
        %vm938 = vcmask 523264
        %v940 = vsel %vm938, %v891, 0
        %v943 = vsel %vm938, %v892, 0
        %v946 = vsel %vm938, %v893, 0
        %v949 = vsel %vm938, %v894, 0
        %v952 = vsel %vm938, %v895, 0
        %v955 = vsel %vm938, %v896, 0
        %v958 = vsel %vm938, %v897, 0
        %v961 = vsel %vm938, %v898, 0
        %963 = vmatprep.subr.bf16.mxu0 0
        %964 = vmatpush1.bf16.msra.mxu0 %v930
        %965 = vmatprep.subr.bf16.mxu0 0
        %966 = vmatpush1.bf16.msra.mxu0 %v931
        %967 = vmatprep.subr.bf16.mxu0 0
        %968 = vmatpush1.bf16.msra.mxu0 %v932
        %969 = vmatprep.subr.bf16.mxu0 0
        %970 = vmatpush1.bf16.msra.mxu0 %v933
        %971 = vmatprep.subr.bf16.mxu0 0
        %972 = vmatpush1.bf16.msra.mxu0 0
        %973 = vmatprep.subr.bf16.mxu0 0
        %974 = vmatpush1.bf16.msra.mxu0 0
        %975 = vmatprep.subr.bf16.mxu0 0
        %976 = vmatpush1.bf16.msra.mxu0 0
        %977 = vmatprep.subr.bf16.mxu0 0
        %978 = vmatpush1.bf16.msra.mxu0 0
        %979 = vmatprep.subr.bf16.mxu0 0
        %980 = vmatpush1.bf16.msra.mxu0 0
        %981 = vmatprep.subr.bf16.mxu0 0
        %982 = vmatpush1.bf16.msra.mxu0 0
        %983 = vmatprep.subr.bf16.mxu0 0
        %984 = vmatpush1.bf16.msra.mxu0 0
        %985 = vmatprep.subr.bf16.mxu0 0
        %986 = vmatpush1.bf16.msra.mxu0 0
        %987 = vmatprep.subr.bf16.mxu0 0
        %988 = vmatpush1.bf16.msra.mxu0 0
        %989 = vmatprep.subr.bf16.mxu0 0
        %990 = vmatpush1.bf16.msra.mxu0 0
        %991 = vmatprep.subr.bf16.mxu0 0
        %992 = vmatpush1.bf16.msra.mxu0 0
        %993 = vmatprep.subr.bf16.mxu0 0
        %994 = vmatpush1.bf16.msra.mxu0 0
        %995 = vmatprep.mubr.bf16.mxu0 0
        %996 = vmatmul.mubr.bf16.gmra.mrb[0].mxu0 %v940
        %v997 = vpop.f32.mrb[0].mxu0
        %v998 = vadd.f32 %v912, %v997
        %v999 = vpop.f32.mrb[0].mxu0
        %v1000 = vpop.f32.mrb[0].mxu0
        %v1001 = vadd.f32 %v912, %v1000
        %v1002 = vpop.f32.mrb[0].mxu0
        %1003 = vmatprep.mubr.bf16.mxu0 0
        %1004 = vmatmul.mubr.bf16.gmra.mrb[0].mxu0 %v943
        %v1005 = vpop.f32.mrb[0].mxu0
        %v1006 = vadd.f32 %v912, %v1005
        %v1007 = vpop.f32.mrb[0].mxu0
        %v1008 = vpop.f32.mrb[0].mxu0
        %v1009 = vadd.f32 %v912, %v1008
        %v1010 = vpop.f32.mrb[0].mxu0
        %1011 = vmatprep.mubr.bf16.mxu0 0
        %1012 = vmatmul.mubr.bf16.gmra.mrb[0].mxu0 %v946
        %v1013 = vpop.f32.mrb[0].mxu0
        %v1014 = vadd.f32 %v912, %v1013
        %v1015 = vpop.f32.mrb[0].mxu0
        %v1016 = vpop.f32.mrb[0].mxu0
        %v1017 = vadd.f32 %v912, %v1016
        %v1018 = vpop.f32.mrb[0].mxu0
        %1019 = vmatprep.mubr.bf16.mxu0 0
        %1020 = vmatmul.mubr.bf16.gmra.mrb[0].mxu0 %v949
        %v1021 = vpop.f32.mrb[0].mxu0
        %v1022 = vadd.f32 %v912, %v1021
        %v1023 = vpop.f32.mrb[0].mxu0
        %v1024 = vpop.f32.mrb[0].mxu0
        %v1025 = vadd.f32 %v912, %v1024
        %v1026 = vpop.f32.mrb[0].mxu0
        %1027 = vmatprep.mubr.bf16.mxu0 0
        %1028 = vmatmul.mubr.bf16.gmra.mrb[0].mxu0 %v952
        %v1029 = vpop.f32.mrb[0].mxu0
        %v1030 = vadd.f32 %v912, %v1029
        %v1031 = vpop.f32.mrb[0].mxu0
        %v1032 = vpop.f32.mrb[0].mxu0
        %v1033 = vadd.f32 %v912, %v1032
        %v1034 = vpop.f32.mrb[0].mxu0
        %1035 = vmatprep.mubr.bf16.mxu0 0
        %1036 = vmatmul.mubr.bf16.gmra.mrb[0].mxu0 %v955
        %v1037 = vpop.f32.mrb[0].mxu0
        %v1038 = vadd.f32 %v912, %v1037
        %v1039 = vpop.f32.mrb[0].mxu0
        %v1040 = vpop.f32.mrb[0].mxu0
        %v1041 = vadd.f32 %v912, %v1040
        %v1042 = vpop.f32.mrb[0].mxu0
        %1043 = vmatprep.mubr.bf16.mxu0 0
        %1044 = vmatmul.mubr.bf16.gmra.mrb[0].mxu0 %v958
        %v1045 = vpop.f32.mrb[0].mxu0
        %v1046 = vadd.f32 %v912, %v1045
        %v1047 = vpop.f32.mrb[0].mxu0
        %v1048 = vpop.f32.mrb[0].mxu0
        %v1049 = vadd.f32 %v912, %v1048
        %v1050 = vpop.f32.mrb[0].mxu0
        %1051 = vmatprep.mubr.bf16.mxu0 0
        %1052 = vmatmul.mubr.bf16.gmra.mrb[0].mxu0 %v961
        %v1053 = vpop.f32.mrb[0].mxu0
        %v1054 = vadd.f32 %v912, %v1053
        %v1055 = vpop.f32.mrb[0].mxu0
        %v1056 = vpop.f32.mrb[0].mxu0
        %v1057 = vadd.f32 %v912, %v1056
        %v1058 = vpop.f32.mrb[0].mxu0
        %1059 = vdwg.mxu0
        %v1060 = vtanh.pop %v998
        %v1061 = vtanh.pop %v1001
        %v1062 = vtanh.pop %v1006
        %v1063 = vtanh.pop %v1009
        %v1064 = vtanh.pop %v1014
        %v1065 = vtanh.pop %v1017
        %v1066 = vtanh.pop %v1022
        %v1067 = vtanh.pop %v1025
        %v1068 = vtanh.pop %v1030
        %v1069 = vtanh.pop %v1033
        %v1070 = vtanh.pop %v1038
        %v1071 = vtanh.pop %v1041
        %v1072 = vtanh.pop %v1046
        %v1073 = vtanh.pop %v1049
        %v1074 = vtanh.pop %v1054
        %v1075 = vtanh.pop %v1057
        %v1076 = vpack.c.bf16 %v1061, %v1060
        %v1077 = vpack.c.bf16 %v1063, %v1062
        %v1078 = vpack.c.bf16 %v1065, %v1064
        %v1079 = vpack.c.bf16 %v1067, %v1066
        %v1080 = vpack.c.bf16 %v1069, %v1068
        %v1081 = vpack.c.bf16 %v1071, %v1070
        %v1082 = vpack.c.bf16 %v1073, %v1072
        %v1083 = vpack.c.bf16 %v1075, %v1074
        %v1084 = vld [vmem:[#allocation8] sm:$0xff]
        %v1085 = vld [vmem:[#allocation8 + $0x8] sm:$0xff]
        %v1086 = vld [vmem:[%s7] sm:$0x3]
        %v1088 = vlaneseq
        %v1089 = vshrl.u32 %v1088, 7
        %v1090 = vsub.s32 0, %v1089
        %v1091 = vrot.slane %v1086, %v1090
        %v1092 = vlaneseq
        %v1093 = vshrl.u32 %v1092, 7
        %v1094 = vsub.s32 1, %v1093
        %v1095 = vrot.slane %v1086, %v1094
        %v1100 = vunpack.c.l.b16 %v1084
        %v1101 = vunpack.c.h.b16 %v1084
        %v1102 = vunpack.c.l.b16 %v1085
        %v1103 = vunpack.c.h.b16 %v1085
        %v1104 = vpack.c.b16 %v1102, %v1100
        %v1105 = vpack.c.b16 %v1103, %v1101
        %vm1108 = vcmask 130048
        %v1110 = vsel %vm1108, %v1076, 0
        %v1113 = vsel %vm1108, %v1077, 0
        %v1116 = vsel %vm1108, %v1078, 0
        %v1119 = vsel %vm1108, %v1079, 0
        %v1122 = vsel %vm1108, %v1080, 0
        %v1125 = vsel %vm1108, %v1081, 0
        %v1128 = vsel %vm1108, %v1082, 0
        %v1131 = vsel %vm1108, %v1083, 0
        %1133 = vmatprep.subr.bf16.mxu0 %v1105
        %1134 = vmatpush1.bf16.msra.mxu0 %v1104
        %1135 = vmatprep.subr.bf16.mxu0 0
        %1136 = vmatpush1.bf16.msra.mxu0 0
        %1137 = vmatprep.subr.bf16.mxu0 0
        %1138 = vmatpush1.bf16.msra.mxu0 0
        %1139 = vmatprep.subr.bf16.mxu0 0
        %1140 = vmatpush1.bf16.msra.mxu0 0
        %1141 = vmatprep.subr.bf16.mxu0 0
        %1142 = vmatpush1.bf16.msra.mxu0 0
        %1143 = vmatprep.subr.bf16.mxu0 0
        %1144 = vmatpush1.bf16.msra.mxu0 0
        %1145 = vmatprep.subr.bf16.mxu0 0
        %1146 = vmatpush1.bf16.msra.mxu0 0
        %1147 = vmatprep.subr.bf16.mxu0 0
        %1148 = vmatpush1.bf16.msra.mxu0 0
        %1149 = vmatprep.subr.bf16.mxu0 0
        %1150 = vmatpush1.bf16.msra.mxu0 0
        %1151 = vmatprep.subr.bf16.mxu0 0
        %1152 = vmatpush1.bf16.msra.mxu0 0
        %1153 = vmatprep.subr.bf16.mxu0 0
        %1154 = vmatpush1.bf16.msra.mxu0 0
        %1155 = vmatprep.subr.bf16.mxu0 0
        %1156 = vmatpush1.bf16.msra.mxu0 0
        %1157 = vmatprep.subr.bf16.mxu0 0
        %1158 = vmatpush1.bf16.msra.mxu0 0
        %1159 = vmatprep.subr.bf16.mxu0 0
        %1160 = vmatpush1.bf16.msra.mxu0 0
        %1161 = vmatprep.subr.bf16.mxu0 0
        %1162 = vmatpush1.bf16.msra.mxu0 0
        %1163 = vmatprep.subr.bf16.mxu0 0
        %1164 = vmatpush1.bf16.msra.mxu0 0
        %1165 = vmatprep.mubr.bf16.mxu0 0
        %1166 = vmatmul.mubr.bf16.gmra.mrb[0].mxu0 %v1110
        %v1167 = vpop.f32.mrb[0].mxu0
        %v1168 = vadd.f32 %v1091, %v1167
        %v1169 = vpop.f32.mrb[0].mxu0
        %v1170 = vadd.f32 %v1095, %v1169
        %v1171 = vpop.f32.mrb[0].mxu0
        %v1172 = vadd.f32 %v1091, %v1171
        %v1173 = vpop.f32.mrb[0].mxu0
        %v1174 = vadd.f32 %v1095, %v1173
        %1175 = vmatprep.mubr.bf16.mxu0 0
        %1176 = vmatmul.mubr.bf16.gmra.mrb[0].mxu0 %v1113
        %v1177 = vpop.f32.mrb[0].mxu0
        %v1178 = vadd.f32 %v1091, %v1177
        %v1179 = vpop.f32.mrb[0].mxu0
        %v1180 = vadd.f32 %v1095, %v1179
        %v1181 = vpop.f32.mrb[0].mxu0
        %v1182 = vadd.f32 %v1091, %v1181
        %v1183 = vpop.f32.mrb[0].mxu0
        %v1184 = vadd.f32 %v1095, %v1183
        %1185 = vmatprep.mubr.bf16.mxu0 0
        %1186 = vmatmul.mubr.bf16.gmra.mrb[0].mxu0 %v1116
        %v1187 = vpop.f32.mrb[0].mxu0
        %v1188 = vadd.f32 %v1091, %v1187
        %v1189 = vpop.f32.mrb[0].mxu0
        %v1190 = vadd.f32 %v1095, %v1189
        %v1191 = vpop.f32.mrb[0].mxu0
        %v1192 = vadd.f32 %v1091, %v1191
        %v1193 = vpop.f32.mrb[0].mxu0
        %v1194 = vadd.f32 %v1095, %v1193
        %1195 = vmatprep.mubr.bf16.mxu0 0
        %1196 = vmatmul.mubr.bf16.gmra.mrb[0].mxu0 %v1119
        %v1197 = vpop.f32.mrb[0].mxu0
        %v1198 = vadd.f32 %v1091, %v1197
        %v1199 = vpop.f32.mrb[0].mxu0
        %v1200 = vadd.f32 %v1095, %v1199
        %v1201 = vpop.f32.mrb[0].mxu0
        %v1202 = vadd.f32 %v1091, %v1201
        %v1203 = vpop.f32.mrb[0].mxu0
        %v1204 = vadd.f32 %v1095, %v1203
        %1205 = vmatprep.mubr.bf16.mxu0 0
        %1206 = vmatmul.mubr.bf16.gmra.mrb[0].mxu0 %v1122
        %v1207 = vpop.f32.mrb[0].mxu0
        %v1208 = vadd.f32 %v1091, %v1207
        %v1209 = vpop.f32.mrb[0].mxu0
        %v1210 = vadd.f32 %v1095, %v1209
        %v1211 = vpop.f32.mrb[0].mxu0
        %v1212 = vadd.f32 %v1091, %v1211
        %v1213 = vpop.f32.mrb[0].mxu0
        %v1214 = vadd.f32 %v1095, %v1213
        %1215 = vmatprep.mubr.bf16.mxu0 0
        %1216 = vmatmul.mubr.bf16.gmra.mrb[0].mxu0 %v1125
        %v1217 = vpop.f32.mrb[0].mxu0
        %v1218 = vadd.f32 %v1091, %v1217
        %v1219 = vpop.f32.mrb[0].mxu0
        %v1220 = vadd.f32 %v1095, %v1219
        %v1221 = vpop.f32.mrb[0].mxu0
        %v1222 = vadd.f32 %v1091, %v1221
        %v1223 = vpop.f32.mrb[0].mxu0
        %v1224 = vadd.f32 %v1095, %v1223
        %1225 = vmatprep.mubr.bf16.mxu0 0
        %1226 = vmatmul.mubr.bf16.gmra.mrb[0].mxu0 %v1128
        %v1227 = vpop.f32.mrb[0].mxu0
        %v1228 = vadd.f32 %v1091, %v1227
        %v1229 = vpop.f32.mrb[0].mxu0
        %v1230 = vadd.f32 %v1095, %v1229
        %v1231 = vpop.f32.mrb[0].mxu0
        %v1232 = vadd.f32 %v1091, %v1231
        %v1233 = vpop.f32.mrb[0].mxu0
        %v1234 = vadd.f32 %v1095, %v1233
        %1235 = vmatprep.mubr.bf16.mxu0 0
        %1236 = vmatmul.mubr.bf16.gmra.mrb[0].mxu0 %v1131
        %v1237 = vpop.f32.mrb[0].mxu0
        %v1238 = vadd.f32 %v1091, %v1237
        %v1239 = vpop.f32.mrb[0].mxu0
        %v1240 = vadd.f32 %v1095, %v1239
        %v1241 = vpop.f32.mrb[0].mxu0
        %v1242 = vadd.f32 %v1091, %v1241
        %v1243 = vpop.f32.mrb[0].mxu0
        %v1244 = vadd.f32 %v1095, %v1243
        %1245 = vdwg.mxu0
        %1246 = vst [vmem:[%s592] sm:$0xff] %v1168
        %1247 = vst [vmem:[%s592 + $0x8] sm:$0xff] %v1170
        %1248 = vst [vmem:[%s592 + $0x10] sm:$0xff] %v1172
        %1249 = vst [vmem:[%s592 + $0x18] sm:$0xff] %v1174
        %1250 = vst [vmem:[%s592 + $0x20] sm:$0xff] %v1178
        %1251 = vst [vmem:[%s592 + $0x28] sm:$0xff] %v1180
        %1252 = vst [vmem:[%s592 + $0x30] sm:$0xff] %v1182
        %1253 = vst [vmem:[%s592 + $0x38] sm:$0xff] %v1184
        %1254 = vst [vmem:[%s592 + $0x40] sm:$0xff] %v1188
        %1255 = vst [vmem:[%s592 + $0x48] sm:$0xff] %v1190
        %1256 = vst [vmem:[%s592 + $0x50] sm:$0xff] %v1192
        %1257 = vst [vmem:[%s592 + $0x58] sm:$0xff] %v1194
        %1258 = vst [vmem:[%s592 + $0x60] sm:$0xff] %v1198
        %1259 = vst [vmem:[%s592 + $0x68] sm:$0xff] %v1200
        %1260 = vst [vmem:[%s592 + $0x70] sm:$0xff] %v1202
        %1261 = vst [vmem:[%s592 + $0x78] sm:$0xff] %v1204
        %1262 = vst [vmem:[%s592 + $0x80] sm:$0xff] %v1208
        %1263 = vst [vmem:[%s592 + $0x88] sm:$0xff] %v1210
        %1264 = vst [vmem:[%s592 + $0x90] sm:$0xff] %v1212
        %1265 = vst [vmem:[%s592 + $0x98] sm:$0xff] %v1214
        %1266 = vst [vmem:[%s592 + $0xa0] sm:$0xff] %v1218
        %1267 = vst [vmem:[%s592 + $0xa8] sm:$0xff] %v1220
        %1268 = vst [vmem:[%s592 + $0xb0] sm:$0xff] %v1222
        %1269 = vst [vmem:[%s592 + $0xb8] sm:$0xff] %v1224
        %1270 = vst [vmem:[%s592 + $0xc0] sm:$0xff] %v1228
        %1271 = vst [vmem:[%s592 + $0xc8] sm:$0xff] %v1230
        %1272 = vst [vmem:[%s592 + $0xd0] sm:$0xff] %v1232
        %1273 = vst [vmem:[%s592 + $0xd8] sm:$0xff] %v1234
        %1274 = vst [vmem:[%s592 + $0xe0] sm:$0xff] %v1238
        %1275 = vst [vmem:[%s592 + $0xe8] sm:$0xff] %v1240
        %1276 = vst [vmem:[%s592 + $0xf0] sm:$0xff] %v1242
        %1277 = vst [vmem:[%s592 + $0xf8] sm:$0xff] %v1244
        %v1278 = vld [vmem:[%s584] sm:$0xff]
        %v1279 = vld [vmem:[%s584 + $0x8] sm:$0xff]
        %v1280 = vld [vmem:[%s584 + $0x10] sm:$0xff]
        %v1281 = vld [vmem:[%s584 + $0x18] sm:$0xff]
        %v1282 = vld [vmem:[%s584 + $0x20] sm:$0xff]
        %v1283 = vld [vmem:[%s584 + $0x28] sm:$0xff]
        %v1284 = vld [vmem:[%s584 + $0x30] sm:$0xff]
        %v1285 = vld [vmem:[%s584 + $0x38] sm:$0xff]
        %v1286 = vld [vmem:[%s584 + $0x40] sm:$0xff]
        %v1287 = vld [vmem:[%s584 + $0x48] sm:$0xff]
        %v1288 = vld [vmem:[%s584 + $0x50] sm:$0xff]
        %v1289 = vld [vmem:[%s584 + $0x58] sm:$0xff]
        %v1290 = vld [vmem:[%s584 + $0x60] sm:$0xff]
        %v1291 = vld [vmem:[%s584 + $0x68] sm:$0xff]
        %v1292 = vld [vmem:[%s584 + $0x70] sm:$0xff]
        %v1293 = vld [vmem:[%s584 + $0x78] sm:$0xff]
        %v1294 = vmul.f32 %v1170, 0.5
        %v1295 = vmul.f32 %v1174, 0.5
        %v1296 = vmul.f32 %v1180, 0.5
        %v1297 = vmul.f32 %v1184, 0.5
        %v1298 = vmul.f32 %v1190, 0.5
        %v1299 = vmul.f32 %v1194, 0.5
        %v1300 = vmul.f32 %v1200, 0.5
        %v1301 = vmul.f32 %v1204, 0.5
        %v1302 = vmul.f32 %v1210, 0.5
        %v1303 = vmul.f32 %v1214, 0.5
        %v1304 = vmul.f32 %v1220, 0.5
        %v1305 = vmul.f32 %v1224, 0.5
        %v1306 = vmul.f32 %v1230, 0.5
        %v1307 = vmul.f32 %v1234, 0.5
        %v1308 = vmul.f32 %v1240, 0.5
        %v1309 = vmul.f32 %v1244, 0.5
        %v1310 = vmul.f32 %v1294, 1.442695
        %v1311 = vpow.pop %v1310
        %v1312 = vmul.f32 %v1295, 1.442695
        %v1313 = vpow.pop %v1312
        %v1314 = vmul.f32 %v1296, 1.442695
        %v1315 = vpow.pop %v1314
        %v1316 = vmul.f32 %v1297, 1.442695
        %v1317 = vpow.pop %v1316
        %v1318 = vmul.f32 %v1298, 1.442695
        %v1319 = vpow.pop %v1318
        %v1320 = vmul.f32 %v1299, 1.442695
        %v1321 = vpow.pop %v1320
        %v1322 = vmul.f32 %v1300, 1.442695
        %v1323 = vpow.pop %v1322
        %v1324 = vmul.f32 %v1301, 1.442695
        %v1325 = vpow.pop %v1324
        %v1326 = vmul.f32 %v1302, 1.442695
        %v1327 = vpow.pop %v1326
        %v1328 = vmul.f32 %v1303, 1.442695
        %v1329 = vpow.pop %v1328
        %v1330 = vmul.f32 %v1304, 1.442695
        %v1331 = vpow.pop %v1330
        %v1332 = vmul.f32 %v1305, 1.442695
        %v1333 = vpow.pop %v1332
        %v1334 = vmul.f32 %v1306, 1.442695
        %v1335 = vpow.pop %v1334
        %v1336 = vmul.f32 %v1307, 1.442695
        %v1337 = vpow.pop %v1336
        %v1338 = vmul.f32 %v1308, 1.442695
        %v1339 = vpow.pop %v1338
        %v1340 = vmul.f32 %v1309, 1.442695
        %v1341 = vpow.pop %v1340
        %v1342 = vmul.f32 %v1278, %v1311
        %v1343 = vmul.f32 %v1279, %v1313
        %v1344 = vmul.f32 %v1280, %v1315
        %v1345 = vmul.f32 %v1281, %v1317
        %v1346 = vmul.f32 %v1282, %v1319
        %v1347 = vmul.f32 %v1283, %v1321
        %v1348 = vmul.f32 %v1284, %v1323
        %v1349 = vmul.f32 %v1285, %v1325
        %v1350 = vmul.f32 %v1286, %v1327
        %v1351 = vmul.f32 %v1287, %v1329
        %v1352 = vmul.f32 %v1288, %v1331
        %v1353 = vmul.f32 %v1289, %v1333
        %v1354 = vmul.f32 %v1290, %v1335
        %v1355 = vmul.f32 %v1291, %v1337
        %v1356 = vmul.f32 %v1292, %v1339
        %v1357 = vmul.f32 %v1293, %v1341
        %v1358 = vadd.f32 %v1342, %v1168
        %v1359 = vadd.f32 %v1343, %v1172
        %v1360 = vadd.f32 %v1344, %v1178
        %v1361 = vadd.f32 %v1345, %v1182
        %v1362 = vadd.f32 %v1346, %v1188
        %v1363 = vadd.f32 %v1347, %v1192
        %v1364 = vadd.f32 %v1348, %v1198
        %v1365 = vadd.f32 %v1349, %v1202
        %v1366 = vadd.f32 %v1350, %v1208
        %v1367 = vadd.f32 %v1351, %v1212
        %v1368 = vadd.f32 %v1352, %v1218
        %v1369 = vadd.f32 %v1353, %v1222
        %v1370 = vadd.f32 %v1354, %v1228
        %v1371 = vadd.f32 %v1355, %v1232
        %v1372 = vadd.f32 %v1356, %v1238
        %v1373 = vadd.f32 %v1357, %v1242
        %v1374 = vpack.c.bf16 %v1359, %v1358
        %v1375 = vpack.c.bf16 %v1361, %v1360
        %v1376 = vpack.c.bf16 %v1363, %v1362
        %v1377 = vpack.c.bf16 %v1365, %v1364
        %v1378 = vpack.c.bf16 %v1367, %v1366
        %v1379 = vpack.c.bf16 %v1369, %v1368
        %v1380 = vpack.c.bf16 %v1371, %v1370
        %v1381 = vpack.c.bf16 %v1373, %v1372
        %v1382 = vld [vmem:[%s8] sm:$0xf]
        %v1383 = vld [vmem:[%s8 + $0x4] sm:$0xf]
        %v1384 = vld [vmem:[%s8 + $0x8] sm:$0xf]
        %v1385 = vld [vmem:[%s8 + $0xc] sm:$0xf]
        %v1386 = vld [vmem:[%s8 + $0x10] sm:$0xf]
        %v1387 = vld [vmem:[%s8 + $0x14] sm:$0xf]
        %v1388 = vld [vmem:[%s8 + $0x18] sm:$0xf]
        %v1389 = vld [vmem:[%s8 + $0x1c] sm:$0xf]
        %v1390 = vld [vmem:[%s8 + $0x20] sm:$0xf]
        %v1391 = vld [vmem:[%s8 + $0x24] sm:$0xf]
        %v1392 = vld [vmem:[%s8 + $0x28] sm:$0xf]
        %v1393 = vld [vmem:[%s8 + $0x2c] sm:$0xf]
        %v1394 = vld [vmem:[%s8 + $0x30] sm:$0xf]
        %v1395 = vld [vmem:[%s8 + $0x34] sm:$0xf]
        %v1396 = vld [vmem:[%s8 + $0x38] sm:$0xf]
        %v1397 = vld [vmem:[%s8 + $0x3c] sm:$0xf]
        %v1398 = vld [vmem:[%s9] sm:$0x1]
        %v1400 = vlaneseq
        %v1401 = vshrl.u32 %v1400, 7
        %v1402 = vsub.s32 0, %v1401
        %v1403 = vrot.slane %v1398, %v1402
        %v1421 = vunpack.c.l.b16 %v1382
        %v1422 = vunpack.c.l.b16 %v1383
        %v1423 = vunpack.c.l.b16 %v1384
        %v1424 = vunpack.c.l.b16 %v1385
        %v1425 = vunpack.c.l.b16 %v1386
        %v1426 = vunpack.c.l.b16 %v1387
        %v1427 = vunpack.c.l.b16 %v1388
        %v1428 = vunpack.c.l.b16 %v1389
        %v1429 = vunpack.c.l.b16 %v1390
        %v1430 = vunpack.c.l.b16 %v1391
        %v1431 = vunpack.c.l.b16 %v1392
        %v1432 = vunpack.c.l.b16 %v1393
        %v1433 = vunpack.c.l.b16 %v1394
        %v1434 = vunpack.c.l.b16 %v1395
        %v1435 = vunpack.c.l.b16 %v1396
        %v1436 = vunpack.c.l.b16 %v1397
        %v1437 = vpack.c.b16 %v1422, %v1421
        %v1438 = vpack.c.b16 %v1424, %v1423
        %v1439 = vpack.c.b16 %v1426, %v1425
        %v1440 = vpack.c.b16 %v1428, %v1427
        %v1441 = vpack.c.b16 %v1430, %v1429
        %v1442 = vpack.c.b16 %v1432, %v1431
        %v1443 = vpack.c.b16 %v1434, %v1433
        %v1444 = vpack.c.b16 %v1436, %v1435
        %1453 = vmatprep.subr.bf16.mxu0 0
        %1454 = vmatpush1.bf16.msra.mxu0 %v1437
        %1455 = vmatprep.subr.bf16.mxu0 0
        %1456 = vmatpush1.bf16.msra.mxu0 %v1438
        %1457 = vmatprep.subr.bf16.mxu0 0
        %1458 = vmatpush1.bf16.msra.mxu0 %v1439
        %1459 = vmatprep.subr.bf16.mxu0 0
        %1460 = vmatpush1.bf16.msra.mxu0 %v1440
        %1461 = vmatprep.subr.bf16.mxu0 0
        %1462 = vmatpush1.bf16.msra.mxu0 %v1441
        %1463 = vmatprep.subr.bf16.mxu0 0
        %1464 = vmatpush1.bf16.msra.mxu0 %v1442
        %1465 = vmatprep.subr.bf16.mxu0 0
        %1466 = vmatpush1.bf16.msra.mxu0 %v1443
        %1467 = vmatprep.subr.bf16.mxu0 0
        %1468 = vmatpush1.bf16.msra.mxu0 %v1444
        %1469 = vmatprep.subr.bf16.mxu0 0
        %1470 = vmatpush1.bf16.msra.mxu0 0
        %1471 = vmatprep.subr.bf16.mxu0 0
        %1472 = vmatpush1.bf16.msra.mxu0 0
        %1473 = vmatprep.subr.bf16.mxu0 0
        %1474 = vmatpush1.bf16.msra.mxu0 0
        %1475 = vmatprep.subr.bf16.mxu0 0
        %1476 = vmatpush1.bf16.msra.mxu0 0
        %1477 = vmatprep.subr.bf16.mxu0 0
        %1478 = vmatpush1.bf16.msra.mxu0 0
        %1479 = vmatprep.subr.bf16.mxu0 0
        %1480 = vmatpush1.bf16.msra.mxu0 0
        %1481 = vmatprep.subr.bf16.mxu0 0
        %1482 = vmatpush1.bf16.msra.mxu0 0
        %1483 = vmatprep.subr.bf16.mxu0 0
        %1484 = vmatpush1.bf16.msra.mxu0 0
        %1485 = vmatprep.mubr.bf16.mxu0 0
        %1486 = vmatmul.mubr.bf16.gmra.mrb[0].mxu0 %v1374
        %v1487 = vpop.f32.mrb[0].mxu0
        %v1488 = vadd.f32 %v1403, %v1487
        %v1489 = vpop.f32.mrb[0].mxu0
        %v1490 = vpop.f32.mrb[0].mxu0
        %v1491 = vadd.f32 %v1403, %v1490
        %v1492 = vpop.f32.mrb[0].mxu0
        %1493 = vmatprep.mubr.bf16.mxu0 0
        %1494 = vmatmul.mubr.bf16.gmra.mrb[0].mxu0 %v1375
        %v1495 = vpop.f32.mrb[0].mxu0
        %v1496 = vadd.f32 %v1403, %v1495
        %v1497 = vpop.f32.mrb[0].mxu0
        %v1498 = vpop.f32.mrb[0].mxu0
        %v1499 = vadd.f32 %v1403, %v1498
        %v1500 = vpop.f32.mrb[0].mxu0
        %1501 = vmatprep.mubr.bf16.mxu0 0
        %1502 = vmatmul.mubr.bf16.gmra.mrb[0].mxu0 %v1376
        %v1503 = vpop.f32.mrb[0].mxu0
        %v1504 = vadd.f32 %v1403, %v1503
        %v1505 = vpop.f32.mrb[0].mxu0
        %v1506 = vpop.f32.mrb[0].mxu0
        %v1507 = vadd.f32 %v1403, %v1506
        %v1508 = vpop.f32.mrb[0].mxu0
        %1509 = vmatprep.mubr.bf16.mxu0 0
        %1510 = vmatmul.mubr.bf16.gmra.mrb[0].mxu0 %v1377
        %v1511 = vpop.f32.mrb[0].mxu0
        %v1512 = vadd.f32 %v1403, %v1511
        %v1513 = vpop.f32.mrb[0].mxu0
        %v1514 = vpop.f32.mrb[0].mxu0
        %v1515 = vadd.f32 %v1403, %v1514
        %v1516 = vpop.f32.mrb[0].mxu0
        %1517 = vmatprep.mubr.bf16.mxu0 0
        %1518 = vmatmul.mubr.bf16.gmra.mrb[0].mxu0 %v1378
        %v1519 = vpop.f32.mrb[0].mxu0
        %v1520 = vadd.f32 %v1403, %v1519
        %v1521 = vpop.f32.mrb[0].mxu0
        %v1522 = vpop.f32.mrb[0].mxu0
        %v1523 = vadd.f32 %v1403, %v1522
        %v1524 = vpop.f32.mrb[0].mxu0
        %1525 = vmatprep.mubr.bf16.mxu0 0
        %1526 = vmatmul.mubr.bf16.gmra.mrb[0].mxu0 %v1379
        %v1527 = vpop.f32.mrb[0].mxu0
        %v1528 = vadd.f32 %v1403, %v1527
        %v1529 = vpop.f32.mrb[0].mxu0
        %v1530 = vpop.f32.mrb[0].mxu0
        %v1531 = vadd.f32 %v1403, %v1530
        %v1532 = vpop.f32.mrb[0].mxu0
        %1533 = vmatprep.mubr.bf16.mxu0 0
        %1534 = vmatmul.mubr.bf16.gmra.mrb[0].mxu0 %v1380
        %v1535 = vpop.f32.mrb[0].mxu0
        %v1536 = vadd.f32 %v1403, %v1535
        %v1537 = vpop.f32.mrb[0].mxu0
        %v1538 = vpop.f32.mrb[0].mxu0
        %v1539 = vadd.f32 %v1403, %v1538
        %v1540 = vpop.f32.mrb[0].mxu0
        %1541 = vmatprep.mubr.bf16.mxu0 0
        %1542 = vmatmul.mubr.bf16.gmra.mrb[0].mxu0 %v1381
        %v1543 = vpop.f32.mrb[0].mxu0
        %v1544 = vadd.f32 %v1403, %v1543
        %v1545 = vpop.f32.mrb[0].mxu0
        %v1546 = vpop.f32.mrb[0].mxu0
        %v1547 = vadd.f32 %v1403, %v1546
        %v1548 = vpop.f32.mrb[0].mxu0
        %1549 = vdwg.mxu0
        %v1550 = vtanh.pop %v1488
        %v1551 = vtanh.pop %v1491
        %v1552 = vtanh.pop %v1496
        %v1553 = vtanh.pop %v1499
        %v1554 = vtanh.pop %v1504
        %v1555 = vtanh.pop %v1507
        %v1556 = vtanh.pop %v1512
        %v1557 = vtanh.pop %v1515
        %v1558 = vtanh.pop %v1520
        %v1559 = vtanh.pop %v1523
        %v1560 = vtanh.pop %v1528
        %v1561 = vtanh.pop %v1531
        %v1562 = vtanh.pop %v1536
        %v1563 = vtanh.pop %v1539
        %v1564 = vtanh.pop %v1544
        %v1565 = vtanh.pop %v1547
        %v1566 = vpack.c.bf16 %v1551, %v1550
        %v1567 = vpack.c.bf16 %v1553, %v1552
        %v1568 = vpack.c.bf16 %v1555, %v1554
        %v1569 = vpack.c.bf16 %v1557, %v1556
        %v1570 = vpack.c.bf16 %v1559, %v1558
        %v1571 = vpack.c.bf16 %v1561, %v1560
        %v1572 = vpack.c.bf16 %v1563, %v1562
        %v1573 = vpack.c.bf16 %v1565, %v1564
        %v1574 = vld [vmem:[%s10] sm:$0xf]
        %v1575 = vld [vmem:[%s10 + $0x4] sm:$0xf]
        %v1576 = vld [vmem:[%s11] sm:$0x1]
        %v1578 = vlaneseq
        %v1579 = vshrl.u32 %v1578, 7
        %v1580 = vsub.s32 0, %v1579
        %v1581 = vrot.slane %v1576, %v1580
        %v1585 = vunpack.c.l.b16 %v1574
        %v1586 = vunpack.c.l.b16 %v1575
        %v1587 = vpack.c.b16 %v1586, %v1585
        %v1590 = vsel %vm1108, %v1566, 0
        %v1593 = vsel %vm1108, %v1567, 0
        %v1596 = vsel %vm1108, %v1568, 0
        %v1599 = vsel %vm1108, %v1569, 0
        %v1602 = vsel %vm1108, %v1570, 0
        %v1605 = vsel %vm1108, %v1571, 0
        %v1608 = vsel %vm1108, %v1572, 0
        %v1611 = vsel %vm1108, %v1573, 0
        %1613 = vmatprep.subr.bf16.mxu0 0
        %1614 = vmatpush1.bf16.msra.mxu0 %v1587
        %1615 = vmatprep.subr.bf16.mxu0 0
        %1616 = vmatpush1.bf16.msra.mxu0 0
        %1617 = vmatprep.subr.bf16.mxu0 0
        %1618 = vmatpush1.bf16.msra.mxu0 0
        %1619 = vmatprep.subr.bf16.mxu0 0
        %1620 = vmatpush1.bf16.msra.mxu0 0
        %1621 = vmatprep.subr.bf16.mxu0 0
        %1622 = vmatpush1.bf16.msra.mxu0 0
        %1623 = vmatprep.subr.bf16.mxu0 0
        %1624 = vmatpush1.bf16.msra.mxu0 0
        %1625 = vmatprep.subr.bf16.mxu0 0
        %1626 = vmatpush1.bf16.msra.mxu0 0
        %1627 = vmatprep.subr.bf16.mxu0 0
        %1628 = vmatpush1.bf16.msra.mxu0 0
        %1629 = vmatprep.subr.bf16.mxu0 0
        %1630 = vmatpush1.bf16.msra.mxu0 0
        %1631 = vmatprep.subr.bf16.mxu0 0
        %1632 = vmatpush1.bf16.msra.mxu0 0
        %1633 = vmatprep.subr.bf16.mxu0 0
        %1634 = vmatpush1.bf16.msra.mxu0 0
        %1635 = vmatprep.subr.bf16.mxu0 0
        %1636 = vmatpush1.bf16.msra.mxu0 0
        %1637 = vmatprep.subr.bf16.mxu0 0
        %1638 = vmatpush1.bf16.msra.mxu0 0
        %1639 = vmatprep.subr.bf16.mxu0 0
        %1640 = vmatpush1.bf16.msra.mxu0 0
        %1641 = vmatprep.subr.bf16.mxu0 0
        %1642 = vmatpush1.bf16.msra.mxu0 0
        %1643 = vmatprep.subr.bf16.mxu0 0
        %1644 = vmatpush1.bf16.msra.mxu0 0
        %1645 = vmatprep.mubr.bf16.mxu0 0
        %1646 = vmatmul.mubr.bf16.gmra.mrb[0].mxu0 %v1590
        %v1647 = vpop.f32.mrb[0].mxu0
        %v1648 = vadd.f32 %v1581, %v1647
        %v1649 = vpop.f32.mrb[0].mxu0
        %v1650 = vpop.f32.mrb[0].mxu0
        %v1651 = vadd.f32 %v1581, %v1650
        %v1652 = vpop.f32.mrb[0].mxu0
        %1653 = vmatprep.mubr.bf16.mxu0 0
        %1654 = vmatmul.mubr.bf16.gmra.mrb[0].mxu0 %v1593
        %v1655 = vpop.f32.mrb[0].mxu0
        %v1656 = vadd.f32 %v1581, %v1655
        %v1657 = vpop.f32.mrb[0].mxu0
        %v1658 = vpop.f32.mrb[0].mxu0
        %v1659 = vadd.f32 %v1581, %v1658
        %v1660 = vpop.f32.mrb[0].mxu0
        %1661 = vmatprep.mubr.bf16.mxu0 0
        %1662 = vmatmul.mubr.bf16.gmra.mrb[0].mxu0 %v1596
        %v1663 = vpop.f32.mrb[0].mxu0
        %v1664 = vadd.f32 %v1581, %v1663
        %v1665 = vpop.f32.mrb[0].mxu0
        %v1666 = vpop.f32.mrb[0].mxu0
        %v1667 = vadd.f32 %v1581, %v1666
        %v1668 = vpop.f32.mrb[0].mxu0
        %1669 = vmatprep.mubr.bf16.mxu0 0
        %1670 = vmatmul.mubr.bf16.gmra.mrb[0].mxu0 %v1599
        %v1671 = vpop.f32.mrb[0].mxu0
        %v1672 = vadd.f32 %v1581, %v1671
        %v1673 = vpop.f32.mrb[0].mxu0
        %v1674 = vpop.f32.mrb[0].mxu0
        %v1675 = vadd.f32 %v1581, %v1674
        %v1676 = vpop.f32.mrb[0].mxu0
        %1677 = vmatprep.mubr.bf16.mxu0 0
        %1678 = vmatmul.mubr.bf16.gmra.mrb[0].mxu0 %v1602
        %v1679 = vpop.f32.mrb[0].mxu0
        %v1680 = vadd.f32 %v1581, %v1679
        %v1681 = vpop.f32.mrb[0].mxu0
        %v1682 = vpop.f32.mrb[0].mxu0
        %v1683 = vadd.f32 %v1581, %v1682
        %v1684 = vpop.f32.mrb[0].mxu0
        %1685 = vmatprep.mubr.bf16.mxu0 0
        %1686 = vmatmul.mubr.bf16.gmra.mrb[0].mxu0 %v1605
        %v1687 = vpop.f32.mrb[0].mxu0
        %v1688 = vadd.f32 %v1581, %v1687
        %v1689 = vpop.f32.mrb[0].mxu0
        %v1690 = vpop.f32.mrb[0].mxu0
        %v1691 = vadd.f32 %v1581, %v1690
        %v1692 = vpop.f32.mrb[0].mxu0
        %1693 = vmatprep.mubr.bf16.mxu0 0
        %1694 = vmatmul.mubr.bf16.gmra.mrb[0].mxu0 %v1608
        %v1695 = vpop.f32.mrb[0].mxu0
        %v1696 = vadd.f32 %v1581, %v1695
        %v1697 = vpop.f32.mrb[0].mxu0
        %v1698 = vpop.f32.mrb[0].mxu0
        %v1699 = vadd.f32 %v1581, %v1698
        %v1700 = vpop.f32.mrb[0].mxu0
        %1701 = vmatprep.mubr.bf16.mxu0 0
        %1702 = vmatmul.mubr.bf16.gmra.mrb[0].mxu0 %v1611
        %v1703 = vpop.f32.mrb[0].mxu0
        %v1704 = vadd.f32 %v1581, %v1703
        %v1705 = vpop.f32.mrb[0].mxu0
        %v1706 = vpop.f32.mrb[0].mxu0
        %v1707 = vadd.f32 %v1581, %v1706
        %v1708 = vpop.f32.mrb[0].mxu0
        %1709 = vdwg.mxu0
        %v1710 = vtanh.pop %v1648
        %v1711 = vtanh.pop %v1651
        %v1712 = vtanh.pop %v1656
        %v1713 = vtanh.pop %v1659
        %v1714 = vtanh.pop %v1664
        %v1715 = vtanh.pop %v1667
        %v1716 = vtanh.pop %v1672
        %v1717 = vtanh.pop %v1675
        %v1718 = vtanh.pop %v1680
        %v1719 = vtanh.pop %v1683
        %v1720 = vtanh.pop %v1688
        %v1721 = vtanh.pop %v1691
        %v1722 = vtanh.pop %v1696
        %v1723 = vtanh.pop %v1699
        %v1724 = vtanh.pop %v1704
        %v1725 = vtanh.pop %v1707
        %v1726 = vpack.c.bf16 %v1711, %v1710
        %v1727 = vpack.c.bf16 %v1713, %v1712
        %v1728 = vpack.c.bf16 %v1715, %v1714
        %v1729 = vpack.c.bf16 %v1717, %v1716
        %v1730 = vpack.c.bf16 %v1719, %v1718
        %v1731 = vpack.c.bf16 %v1721, %v1720
        %v1732 = vpack.c.bf16 %v1723, %v1722
        %v1733 = vpack.c.bf16 %v1725, %v1724
        %v1734 = vld [vmem:[%s12] sm:$0xff]
        %v1735 = vld [vmem:[%s12 + $0x8] sm:$0xff]
        %v1736 = vld [vmem:[%s12 + $0x10] sm:$0xff]
        %v1737 = vld [vmem:[%s12 + $0x18] sm:$0xff]
        %v1738 = vld [vmem:[%s12 + $0x20] sm:$0xff]
        %v1739 = vld [vmem:[%s12 + $0x28] sm:$0xff]
        %v1740 = vld [vmem:[%s12 + $0x30] sm:$0xff]
        %v1741 = vld [vmem:[%s12 + $0x38] sm:$0xff]
        %v1742 = vld [vmem:[%s13] sm:$0x3]
        %v1744 = vlaneseq
        %v1745 = vshrl.u32 %v1744, 7
        %v1746 = vsub.s32 0, %v1745
        %v1747 = vrot.slane %v1742, %v1746
        %v1748 = vlaneseq
        %v1749 = vshrl.u32 %v1748, 7
        %v1750 = vsub.s32 1, %v1749
        %v1751 = vrot.slane %v1742, %v1750
        %v1762 = vunpack.c.l.b16 %v1734
        %v1763 = vunpack.c.h.b16 %v1734
        %v1764 = vunpack.c.l.b16 %v1735
        %v1765 = vunpack.c.h.b16 %v1735
        %v1766 = vunpack.c.l.b16 %v1736
        %v1767 = vunpack.c.h.b16 %v1736
        %v1768 = vunpack.c.l.b16 %v1737
        %v1769 = vunpack.c.h.b16 %v1737
        %v1770 = vunpack.c.l.b16 %v1738
        %v1771 = vunpack.c.h.b16 %v1738
        %v1772 = vunpack.c.l.b16 %v1739
        %v1773 = vunpack.c.h.b16 %v1739
        %v1774 = vunpack.c.l.b16 %v1740
        %v1775 = vunpack.c.h.b16 %v1740
        %v1776 = vunpack.c.l.b16 %v1741
        %v1777 = vunpack.c.h.b16 %v1741
        %v1778 = vpack.c.b16 %v1764, %v1762
        %v1779 = vpack.c.b16 %v1765, %v1763
        %v1780 = vpack.c.b16 %v1768, %v1766
        %v1781 = vpack.c.b16 %v1769, %v1767
        %v1782 = vpack.c.b16 %v1772, %v1770
        %v1783 = vpack.c.b16 %v1773, %v1771
        %v1784 = vpack.c.b16 %v1776, %v1774
        %v1785 = vpack.c.b16 %v1777, %v1775
        %v1795 = vsel %vm938, %v1726, 0
        %v1798 = vsel %vm938, %v1727, 0
        %v1801 = vsel %vm938, %v1728, 0
        %v1804 = vsel %vm938, %v1729, 0
        %v1807 = vsel %vm938, %v1730, 0
        %v1810 = vsel %vm938, %v1731, 0
        %v1813 = vsel %vm938, %v1732, 0
        %v1816 = vsel %vm938, %v1733, 0
        %1818 = vmatprep.subr.bf16.mxu0 %v1779
        %1819 = vmatpush1.bf16.msra.mxu0 %v1778
        %1820 = vmatprep.subr.bf16.mxu0 %v1781
        %1821 = vmatpush1.bf16.msra.mxu0 %v1780
        %1822 = vmatprep.subr.bf16.mxu0 %v1783
        %1823 = vmatpush1.bf16.msra.mxu0 %v1782
        %1824 = vmatprep.subr.bf16.mxu0 %v1785
        %1825 = vmatpush1.bf16.msra.mxu0 %v1784
        %1826 = vmatprep.subr.bf16.mxu0 0
        %1827 = vmatpush1.bf16.msra.mxu0 0
        %1828 = vmatprep.subr.bf16.mxu0 0
        %1829 = vmatpush1.bf16.msra.mxu0 0
        %1830 = vmatprep.subr.bf16.mxu0 0
        %1831 = vmatpush1.bf16.msra.mxu0 0
        %1832 = vmatprep.subr.bf16.mxu0 0
        %1833 = vmatpush1.bf16.msra.mxu0 0
        %1834 = vmatprep.subr.bf16.mxu0 0
        %1835 = vmatpush1.bf16.msra.mxu0 0
        %1836 = vmatprep.subr.bf16.mxu0 0
        %1837 = vmatpush1.bf16.msra.mxu0 0
        %1838 = vmatprep.subr.bf16.mxu0 0
        %1839 = vmatpush1.bf16.msra.mxu0 0
        %1840 = vmatprep.subr.bf16.mxu0 0
        %1841 = vmatpush1.bf16.msra.mxu0 0
        %1842 = vmatprep.subr.bf16.mxu0 0
        %1843 = vmatpush1.bf16.msra.mxu0 0
        %1844 = vmatprep.subr.bf16.mxu0 0
        %1845 = vmatpush1.bf16.msra.mxu0 0
        %1846 = vmatprep.subr.bf16.mxu0 0
        %1847 = vmatpush1.bf16.msra.mxu0 0
        %1848 = vmatprep.subr.bf16.mxu0 0
        %1849 = vmatpush1.bf16.msra.mxu0 0
        %1850 = vmatprep.mubr.bf16.mxu0 0
        %1851 = vmatmul.mubr.bf16.gmra.mrb[0].mxu0 %v1795
        %v1852 = vpop.f32.mrb[0].mxu0
        %v1853 = vadd.f32 %v1747, %v1852
        %v1854 = vpop.f32.mrb[0].mxu0
        %v1855 = vadd.f32 %v1751, %v1854
        %v1856 = vpop.f32.mrb[0].mxu0
        %v1857 = vadd.f32 %v1747, %v1856
        %v1858 = vpop.f32.mrb[0].mxu0
        %v1859 = vadd.f32 %v1751, %v1858
        %1860 = vmatprep.mubr.bf16.mxu0 0
        %1861 = vmatmul.mubr.bf16.gmra.mrb[0].mxu0 %v1798
        %v1862 = vpop.f32.mrb[0].mxu0
        %v1863 = vadd.f32 %v1747, %v1862
        %v1864 = vpop.f32.mrb[0].mxu0
        %v1865 = vadd.f32 %v1751, %v1864
        %v1866 = vpop.f32.mrb[0].mxu0
        %v1867 = vadd.f32 %v1747, %v1866
        %v1868 = vpop.f32.mrb[0].mxu0
        %v1869 = vadd.f32 %v1751, %v1868
        %1870 = vmatprep.mubr.bf16.mxu0 0
        %1871 = vmatmul.mubr.bf16.gmra.mrb[0].mxu0 %v1801
        %v1872 = vpop.f32.mrb[0].mxu0
        %v1873 = vadd.f32 %v1747, %v1872
        %v1874 = vpop.f32.mrb[0].mxu0
        %v1875 = vadd.f32 %v1751, %v1874
        %v1876 = vpop.f32.mrb[0].mxu0
        %v1877 = vadd.f32 %v1747, %v1876
        %v1878 = vpop.f32.mrb[0].mxu0
        %v1879 = vadd.f32 %v1751, %v1878
        %1880 = vmatprep.mubr.bf16.mxu0 0
        %1881 = vmatmul.mubr.bf16.gmra.mrb[0].mxu0 %v1804
        %v1882 = vpop.f32.mrb[0].mxu0
        %v1883 = vadd.f32 %v1747, %v1882
        %v1884 = vpop.f32.mrb[0].mxu0
        %v1885 = vadd.f32 %v1751, %v1884
        %v1886 = vpop.f32.mrb[0].mxu0
        %v1887 = vadd.f32 %v1747, %v1886
        %v1888 = vpop.f32.mrb[0].mxu0
        %v1889 = vadd.f32 %v1751, %v1888
        %1890 = vmatprep.mubr.bf16.mxu0 0
        %1891 = vmatmul.mubr.bf16.gmra.mrb[0].mxu0 %v1807
        %v1892 = vpop.f32.mrb[0].mxu0
        %v1893 = vadd.f32 %v1747, %v1892
        %v1894 = vpop.f32.mrb[0].mxu0
        %v1895 = vadd.f32 %v1751, %v1894
        %v1896 = vpop.f32.mrb[0].mxu0
        %v1897 = vadd.f32 %v1747, %v1896
        %v1898 = vpop.f32.mrb[0].mxu0
        %v1899 = vadd.f32 %v1751, %v1898
        %1900 = vmatprep.mubr.bf16.mxu0 0
        %1901 = vmatmul.mubr.bf16.gmra.mrb[0].mxu0 %v1810
        %v1902 = vpop.f32.mrb[0].mxu0
        %v1903 = vadd.f32 %v1747, %v1902
        %v1904 = vpop.f32.mrb[0].mxu0
        %v1905 = vadd.f32 %v1751, %v1904
        %v1906 = vpop.f32.mrb[0].mxu0
        %v1907 = vadd.f32 %v1747, %v1906
        %v1908 = vpop.f32.mrb[0].mxu0
        %v1909 = vadd.f32 %v1751, %v1908
        %1910 = vmatprep.mubr.bf16.mxu0 0
        %1911 = vmatmul.mubr.bf16.gmra.mrb[0].mxu0 %v1813
        %v1912 = vpop.f32.mrb[0].mxu0
        %v1913 = vadd.f32 %v1747, %v1912
        %v1914 = vpop.f32.mrb[0].mxu0
        %v1915 = vadd.f32 %v1751, %v1914
        %v1916 = vpop.f32.mrb[0].mxu0
        %v1917 = vadd.f32 %v1747, %v1916
        %v1918 = vpop.f32.mrb[0].mxu0
        %v1919 = vadd.f32 %v1751, %v1918
        %1920 = vmatprep.mubr.bf16.mxu0 0
        %1921 = vmatmul.mubr.bf16.gmra.mrb[0].mxu0 %v1816
        %v1922 = vpop.f32.mrb[0].mxu0
        %v1923 = vadd.f32 %v1747, %v1922
        %v1924 = vpop.f32.mrb[0].mxu0
        %v1925 = vadd.f32 %v1751, %v1924
        %v1926 = vpop.f32.mrb[0].mxu0
        %v1927 = vadd.f32 %v1747, %v1926
        %v1928 = vpop.f32.mrb[0].mxu0
        %v1929 = vadd.f32 %v1751, %v1928
        %1930 = vdwg.mxu0
        %v1931 = vmul.f32 %v1853, 0.5
        %v1932 = vmul.f32 %v1855, 0.5
        %v1933 = vmul.f32 %v1857, 0.5
        %v1934 = vmul.f32 %v1859, 0.5
        %v1935 = vmul.f32 %v1863, 0.5
        %v1936 = vmul.f32 %v1865, 0.5
        %v1937 = vmul.f32 %v1867, 0.5
        %v1938 = vmul.f32 %v1869, 0.5
        %v1939 = vmul.f32 %v1873, 0.5
        %v1940 = vmul.f32 %v1875, 0.5
        %v1941 = vmul.f32 %v1877, 0.5
        %v1942 = vmul.f32 %v1879, 0.5
        %v1943 = vmul.f32 %v1883, 0.5
        %v1944 = vmul.f32 %v1885, 0.5
        %v1945 = vmul.f32 %v1887, 0.5
        %v1946 = vmul.f32 %v1889, 0.5
        %v1947 = vmul.f32 %v1893, 0.5
        %v1948 = vmul.f32 %v1895, 0.5
        %v1949 = vmul.f32 %v1897, 0.5
        %v1950 = vmul.f32 %v1899, 0.5
        %v1951 = vmul.f32 %v1903, 0.5
        %v1952 = vmul.f32 %v1905, 0.5
        %v1953 = vmul.f32 %v1907, 0.5
        %v1954 = vmul.f32 %v1909, 0.5
        %v1955 = vmul.f32 %v1913, 0.5
        %v1956 = vmul.f32 %v1915, 0.5
        %v1957 = vmul.f32 %v1917, 0.5
        %v1958 = vmul.f32 %v1919, 0.5
        %v1959 = vmul.f32 %v1923, 0.5
        %v1960 = vmul.f32 %v1925, 0.5
        %v1961 = vmul.f32 %v1927, 0.5
        %v1962 = vmul.f32 %v1929, 0.5
        %v1963 = vtanh.pop %v1931
        %v1964 = vtanh.pop %v1932
        %v1965 = vtanh.pop %v1933
        %v1966 = vtanh.pop %v1934
        %v1967 = vtanh.pop %v1935
        %v1968 = vtanh.pop %v1936
        %v1969 = vtanh.pop %v1937
        %v1970 = vtanh.pop %v1938
        %v1971 = vtanh.pop %v1939
        %v1972 = vtanh.pop %v1940
        %v1973 = vtanh.pop %v1941
        %v1974 = vtanh.pop %v1942
        %v1975 = vtanh.pop %v1943
        %v1976 = vtanh.pop %v1944
        %v1977 = vtanh.pop %v1945
        %v1978 = vtanh.pop %v1946
        %v1979 = vtanh.pop %v1947
        %v1980 = vtanh.pop %v1948
        %v1981 = vtanh.pop %v1949
        %v1982 = vtanh.pop %v1950
        %v1983 = vtanh.pop %v1951
        %v1984 = vtanh.pop %v1952
        %v1985 = vtanh.pop %v1953
        %v1986 = vtanh.pop %v1954
        %v1987 = vtanh.pop %v1955
        %v1988 = vtanh.pop %v1956
        %v1989 = vtanh.pop %v1957
        %v1990 = vtanh.pop %v1958
        %v1991 = vtanh.pop %v1959
        %v1992 = vtanh.pop %v1960
        %v1993 = vtanh.pop %v1961
        %v1994 = vtanh.pop %v1962
        %v1995 = vadd.f32 %v1963, 1.0
        %v1996 = vadd.f32 %v1964, 1.0
        %v1997 = vadd.f32 %v1965, 1.0
        %v1998 = vadd.f32 %v1966, 1.0
        %v1999 = vadd.f32 %v1967, 1.0
        %v2000 = vadd.f32 %v1968, 1.0
        %v2001 = vadd.f32 %v1969, 1.0
        %v2002 = vadd.f32 %v1970, 1.0
        %v2003 = vadd.f32 %v1971, 1.0
        %v2004 = vadd.f32 %v1972, 1.0
        %v2005 = vadd.f32 %v1973, 1.0
        %v2006 = vadd.f32 %v1974, 1.0
        %v2007 = vadd.f32 %v1975, 1.0
        %v2008 = vadd.f32 %v1976, 1.0
        %v2009 = vadd.f32 %v1977, 1.0
        %v2010 = vadd.f32 %v1978, 1.0
        %v2011 = vadd.f32 %v1979, 1.0
        %v2012 = vadd.f32 %v1980, 1.0
        %v2013 = vadd.f32 %v1981, 1.0
        %v2014 = vadd.f32 %v1982, 1.0
        %v2015 = vadd.f32 %v1983, 1.0
        %v2016 = vadd.f32 %v1984, 1.0
        %v2017 = vadd.f32 %v1985, 1.0
        %v2018 = vadd.f32 %v1986, 1.0
        %v2019 = vadd.f32 %v1987, 1.0
        %v2020 = vadd.f32 %v1988, 1.0
        %v2021 = vadd.f32 %v1989, 1.0
        %v2022 = vadd.f32 %v1990, 1.0
        %v2023 = vadd.f32 %v1991, 1.0
        %v2024 = vadd.f32 %v1992, 1.0
        %v2025 = vadd.f32 %v1993, 1.0
        %v2026 = vadd.f32 %v1994, 1.0
        %v2027 = vmul.f32 %v1995, 0.5
        %v2028 = vmul.f32 %v1996, 0.5
        %v2029 = vmul.f32 %v1997, 0.5
        %v2030 = vmul.f32 %v1998, 0.5
        %v2031 = vmul.f32 %v1999, 0.5
        %v2032 = vmul.f32 %v2000, 0.5
        %v2033 = vmul.f32 %v2001, 0.5
        %v2034 = vmul.f32 %v2002, 0.5
        %v2035 = vmul.f32 %v2003, 0.5
        %v2036 = vmul.f32 %v2004, 0.5
        %v2037 = vmul.f32 %v2005, 0.5
        %v2038 = vmul.f32 %v2006, 0.5
        %v2039 = vmul.f32 %v2007, 0.5
        %v2040 = vmul.f32 %v2008, 0.5
        %v2041 = vmul.f32 %v2009, 0.5
        %v2042 = vmul.f32 %v2010, 0.5
        %v2043 = vmul.f32 %v2011, 0.5
        %v2044 = vmul.f32 %v2012, 0.5
        %v2045 = vmul.f32 %v2013, 0.5
        %v2046 = vmul.f32 %v2014, 0.5
        %v2047 = vmul.f32 %v2015, 0.5
        %v2048 = vmul.f32 %v2016, 0.5
        %v2049 = vmul.f32 %v2017, 0.5
        %v2050 = vmul.f32 %v2018, 0.5
        %v2051 = vmul.f32 %v2019, 0.5
        %v2052 = vmul.f32 %v2020, 0.5
        %v2053 = vmul.f32 %v2021, 0.5
        %v2054 = vmul.f32 %v2022, 0.5
        %v2055 = vmul.f32 %v2023, 0.5
        %v2056 = vmul.f32 %v2024, 0.5
        %v2057 = vmul.f32 %v2025, 0.5
        %v2058 = vmul.f32 %v2026, 0.5
        %2059 = vst [vmem:[%s570] sm:$0xff] %v2027
        %2060 = vst [vmem:[%s570 + $0x8] sm:$0xff] %v2028
        %2061 = vst [vmem:[%s570 + $0x10] sm:$0xff] %v2029
        %2062 = vst [vmem:[%s570 + $0x18] sm:$0xff] %v2030
        %2063 = vst [vmem:[%s570 + $0x20] sm:$0xff] %v2031
        %2064 = vst [vmem:[%s570 + $0x28] sm:$0xff] %v2032
        %2065 = vst [vmem:[%s570 + $0x30] sm:$0xff] %v2033
        %2066 = vst [vmem:[%s570 + $0x38] sm:$0xff] %v2034
        %2067 = vst [vmem:[%s570 + $0x40] sm:$0xff] %v2035
        %2068 = vst [vmem:[%s570 + $0x48] sm:$0xff] %v2036
        %2069 = vst [vmem:[%s570 + $0x50] sm:$0xff] %v2037
        %2070 = vst [vmem:[%s570 + $0x58] sm:$0xff] %v2038
        %2071 = vst [vmem:[%s570 + $0x60] sm:$0xff] %v2039
        %2072 = vst [vmem:[%s570 + $0x68] sm:$0xff] %v2040
        %2073 = vst [vmem:[%s570 + $0x70] sm:$0xff] %v2041
        %2074 = vst [vmem:[%s570 + $0x78] sm:$0xff] %v2042
        %2075 = vst [vmem:[%s570 + $0x80] sm:$0xff] %v2043
        %2076 = vst [vmem:[%s570 + $0x88] sm:$0xff] %v2044
        %2077 = vst [vmem:[%s570 + $0x90] sm:$0xff] %v2045
        %2078 = vst [vmem:[%s570 + $0x98] sm:$0xff] %v2046
        %2079 = vst [vmem:[%s570 + $0xa0] sm:$0xff] %v2047
        %2080 = vst [vmem:[%s570 + $0xa8] sm:$0xff] %v2048
        %2081 = vst [vmem:[%s570 + $0xb0] sm:$0xff] %v2049
        %2082 = vst [vmem:[%s570 + $0xb8] sm:$0xff] %v2050
        %2083 = vst [vmem:[%s570 + $0xc0] sm:$0xff] %v2051
        %2084 = vst [vmem:[%s570 + $0xc8] sm:$0xff] %v2052
        %2085 = vst [vmem:[%s570 + $0xd0] sm:$0xff] %v2053
        %2086 = vst [vmem:[%s570 + $0xd8] sm:$0xff] %v2054
        %2087 = vst [vmem:[%s570 + $0xe0] sm:$0xff] %v2055
        %2088 = vst [vmem:[%s570 + $0xe8] sm:$0xff] %v2056
        %2089 = vst [vmem:[%s570 + $0xf0] sm:$0xff] %v2057
        %2090 = vst [vmem:[%s570 + $0xf8] sm:$0xff] %v2058
        %s2091 = sand.u32 %s347, 1
        %s2092 = scalar_lea.sflag [#allocation4], %s2091
        %s2093 = sand.u32 %s347, 1
        %s2094 = smul.addr %s2093, 256
        %s2095 = scalar_lea.vmem [#allocation10], %s2094
        %s2096 = smul.u32 16, %s35
        %p2097 = scmp.lt.s32.totalorder %s2096, 31
        %s2098 = scalar_select %p2097, %s2096, 31
        %s2099 = smul.addr %s2098, 2
        %s2100 = smul.addr %s2099, 8
        %s2101 = scalar_lea.vmem %s15, %s2100
        // Predicated region
        $region93: #{vae_forward.1} parent=75 // pred_check
          %p2102 = pneg %p357
        $region94: #{vae_forward.1} parent=75 // pred_check_branch
          %2104 = sbr.rel (%p2102) target = $region96
        $region95: #{vae_forward.1} parent=75 // pred_region
          %s2105 = smul.u32 16, %s35
          %s2107 = ssub.s32 4096, 4096
          %2108 = vsyncadd %s2092, %s2107
          %s2109 = smul.addr %s2105, 2
          %s2110 = smul.addr %s2109, 128
          %s2111 = scalar_lea.hbm %s14, %s2110
          %s2112 = sshll.u32 %s2095, 4
          %s2113 = int_to_ptr.vmem [resolvable:$true] %s2112
          %2118 = dma.vmem_to_hbm [thread:$0]  %s2113, 4096, %s2111, %s2092, 256, 256, 16
        $region96: #{vae_forward.1} parent=75 // pred_fallthru
          _
        // Predicated region
        $region97: #{vae_forward.1} parent=75 // pred_check
          %p2119 = pneg %p383
        $region98: #{vae_forward.1} parent=75 // pred_check_branch
          %2121 = sbr.rel (%p2119) target = $region100
        $region99: #{vae_forward.1} parent=75 // pred_region
          %s2122 = smul.u32 16, %s35
        $region100: #{vae_forward.1} parent=75 // pred_fallthru
          _
      $region76: #{vae_forward.1} parent=5 // pred_fallthru
        _
      %p2123 = scmp.le.s32.totalorder 2, %s30
      // Predicated region
      $region101: #{vae_forward.1} parent=5 // pred_check
        %p2124 = pneg %p2123
      $region102: #{vae_forward.1} parent=5 // pred_check_branch
        %2126 = sbr.rel (%p2124) target = $region104
      $region103: #{vae_forward.1} parent=5 // pred_region
        %s2127 = ssub.s32 %s30, 2
        // Predicated region
        $region105: #{vae_forward.1} parent=103 // pred_check
          %p2128 = pneg %p363
        $region106: #{vae_forward.1} parent=103 // pred_check_branch
          %2130 = sbr.rel (%p2128) target = $region108
        $region107: #{vae_forward.1} parent=103 // pred_region
          %s2131 = sand.u32 %s348, 1
          %s2132 = scalar_lea.sflag [#allocation4], %s2131
          %s2133 = sand.u32 %s348, 1
          %s2134 = smul.addr %s2133, 256
          %s2135 = scalar_lea.vmem [#allocation10], %s2134
          %2136 = dma.done %s2132, 4096
        $region108: #{vae_forward.1} parent=103 // pred_fallthru
          _
        // Predicated region
        $region109: #{vae_forward.1} parent=103 // pred_check
          %p2137 = pneg %p389
        $region110: #{vae_forward.1} parent=103 // pred_check_branch
          %2139 = sbr.rel (%p2137) target = $region112
        $region111: #{vae_forward.1} parent=103 // pred_region
          %s2140 = smul.u32 16, %s36
          %p2141 = scmp.lt.s32.totalorder %s2140, 31
          %s2142 = scalar_select %p2141, %s2140, 31
          %s2143 = smul.addr %s2142, 2
          %s2144 = smul.addr %s2143, 8
          %s2145 = scalar_lea.vmem %s15, %s2144
        $region112: #{vae_forward.1} parent=103 // pred_fallthru
          _
      $region104: #{vae_forward.1} parent=5 // pred_fallthru
        _
    $region6: #{vae_forward.1} parent=1 // loop_footer
      %s34 = sadd.s32 1, %s30
    $region7: #{vae_forward.1} parent=1 // loop_footer_branch
      %29 = sbr.rel target = $region3
    $region8: #{vae_forward.1} parent=1 // loop_exit
      _
    %2146 = vsyncpa [#allocation3], 1
    %s2147 = scalar_lea.sflag [#allocation3], 1
    %2148 = vsyncpa %s2147, 1
    %2149 = vsyncpa [#allocation6], 1
    %2150 = vsyncpa [#allocation9], 1
    %2151 = vsyncpa [#allocation4], 1
    %s2152 = scalar_lea.sflag [#allocation4], 1
    %2153 = vsyncpa %s2152, 1

</llo_original>
